<compile_context>
chip_gen: v6e
topology: v6e:2x2x1
jax: 0.10.0
libtpu: 0.0.40
codegen_flags: <defaults>
</compile_context>

<pallas_src>
import jax
import jax.numpy as jnp
from jax import lax
from jax.experimental import pallas as pl
from jax.experimental.pallas import tpu as pltpu


def _round_up(n: int, m: int) -> int:
    return ((n + m - 1) // m) * m


def _sigmoid(x):
    # sigmoid(x) == 0.5 * tanh(0.5 * x) + 0.5 : one EUP push + a VPU fma,
    # instead of exp + divide.  Cuts EUP work on the serial per-step chain.
    return 0.5 * jnp.tanh(0.5 * x) + 0.5


def lstm_kernel(x_ref, wih_ref, whh_ref, b_ref, h_out_ref, c_out_ref, pre_ref):
    """Single-layer LSTM over one (padded) batch tile.

    x_ref   : (S, Bt, Ip)       time-major inputs for this batch tile
    wih_ref : (Ip, 4*Hp)        input->gate weights (transposed, gate-padded)
    whh_ref : (Hp, 4*Hp)        hidden->gate weights (transposed, gate-padded)
    b_ref   : (1, 4*Hp)         combined bias b_ih + b_hh (f32, gate-padded)
    h_out_ref, c_out_ref : (Bt, Hp)  final hidden / cell state (f32)
    pre_ref : (2*C, Bt, 4*Hp)   f32 double-buffered pre-gate scratch
                                (two sequence chunks of C timesteps)

    The sequence is processed in chunks of C timesteps: while the serial,
    latency-bound recurrence consumes chunk k, the MXU input projection
    x @ W_ih^T + b for chunk k+1 is issued into the other pre-gate slot, so
    the projection cost hides behind the recurrence and the pre-gate scratch
    is capped at 2 chunks instead of the whole sequence.
    """
    S, Bt, Ip = x_ref.shape
    Hp = whh_ref.shape[0]
    G = 4 * Hp
    C = pre_ref.shape[0] // 2          # chunk length (static)
    n_full = S // C                    # number of full chunks (static, >= 1)
    R = S - n_full * C                 # tail length (static)

    def project(x_start, length, dst_start):
        # Input projection for `length` timesteps in one MXU matmul.
        xc = x_ref[pl.ds(x_start, length)].reshape(length * Bt, Ip)
        pre = jnp.dot(xc, wih_ref[...], preferred_element_type=jnp.float32)
        pre = pre + b_ref[...]
        pre_ref[pl.ds(dst_start, length)] = pre.reshape(length, Bt, G)

    def recur(base, length, carry):
        def step(t, hc):
            h, c = hc
            # whh_ref is indexed inside the step (not hoisted) so the resident
            # weight value is not pinned across the partially unrolled body.
            gates = pre_ref[base + t] + jnp.dot(
                h.astype(whh_ref.dtype), whh_ref[...],
                preferred_element_type=jnp.float32)
            # PyTorch LSTM gate order: input, forget, cell(g), output.
            # Hp is a multiple of 128 -> whole, lane-aligned vreg slices.
            i_g = _sigmoid(gates[:, 0 * Hp:1 * Hp])
            f_g = _sigmoid(gates[:, 1 * Hp:2 * Hp])
            g_g = jnp.tanh(gates[:, 2 * Hp:3 * Hp])
            o_g = _sigmoid(gates[:, 3 * Hp:4 * Hp])
            c_new = f_g * c + i_g * g_g
            h_new = o_g * jnp.tanh(c_new)
            return h_new, c_new
        # Small fixed partial unroll: cross-iteration pipelining for the LLO
        # scheduler without the vreg pressure of a full unroll.
        return lax.fori_loop(0, length, step, carry, unroll=min(8, length))

    h0 = jnp.zeros((Bt, Hp), jnp.float32)
    c0 = jnp.zeros((Bt, Hp), jnp.float32)

    # Prime the pipeline: project chunk 0 into slot 0.
    project(0, C, 0)

    def chunk_body(k, carry):
        slot = lax.rem(k, 2)
        if n_full > 1:
            @pl.when(k + 1 < n_full)
            def _():
                # Project the NEXT chunk into the other slot; no data
                # dependence on this chunk's recurrence.
                project((k + 1) * C, C, (1 - slot) * C)
        return recur(slot * C, C, carry)

    carry = lax.fori_loop(0, n_full, chunk_body, (h0, c0))

    if R > 0:
        # Static tail chunk (S not a multiple of C).
        tail_base = (n_full % 2) * C
        project(n_full * C, R, tail_base)
        carry = recur(tail_base, R, carry)

    h_fin, c_fin = carry
    h_out_ref[...] = h_fin.astype(h_out_ref.dtype)
    c_out_ref[...] = c_fin.astype(c_out_ref.dtype)


def encoder_forward(x, w_ih, w_hh, b_ih, b_hh, *, compute_dtype=jnp.bfloat16,
                    seq_chunk=32):
    """Equivalent of Encoder.forward: returns (hidden, cell), each (1, B, H).

    x    : (B, S, I)  batch-first, like nn.LSTM(batch_first=True)
    w_ih : (4H, I), w_hh : (4H, H), b_ih/b_hh : (4H,)   (PyTorch param shapes)
    compute_dtype: dtype of the MXU matmul operands (accumulation is f32).
    """
    B, S, I = x.shape
    H = w_ih.shape[0] // 4

    I_p = _round_up(I, 128)                 # lane-align the input features
    H_p = _round_up(H, 128)                 # lane-align each gate
    # NOTE: for H << 128 the per-gate padding dominates; tile-size conclusions
    # should be drawn at production H (>= 128), where this layout is correct.

    # Batch tiling: sublane-aligned (multiple of 8); split into >= 2 tiles
    # whenever B > 8 so the "parallel" grid axis feeds both v7x TensorCores.
    B8 = _round_up(B, 8)
    B_tile = min(_round_up(-(-B8 // 2), 8), 128)
    B_pad = _round_up(B, B_tile)
    nb = B_pad // B_tile
    assert B_pad % B_tile == 0

    # Sequence chunk for the fused projection/recurrence pipeline inside the
    # kernel; shrink it if the double-buffered f32 pre-gate scratch gets big.
    C = max(1, min(S, seq_chunk))
    while C > 8 and 2 * C * B_tile * 4 * H_p * 4 > (8 << 20):
        C //= 2

    # Time-major, zero-padded, compute-dtype inputs: (S, B_pad, I_p).
    x_tm = jnp.transpose(x, (1, 0, 2))
    x_tm = jnp.pad(x_tm, ((0, 0), (0, B_pad - B), (0, I_p - I)))
    x_tm = x_tm.astype(compute_dtype)

    # Gate-padded, transposed weights (PyTorch gate order i, f, g, o kept).
    # W_ih (4H, I) -> (I_p, 4*H_p): gate k occupies lanes [k*H_p, k*H_p + H).
    wih_g = jnp.transpose(w_ih.reshape(4, H, I), (2, 0, 1))      # (I, 4, H)
    wih_p = (jnp.zeros((I_p, 4, H_p), compute_dtype)
             .at[:I, :, :H].set(wih_g.astype(compute_dtype))
             .reshape(I_p, 4 * H_p))
    whh_g = jnp.transpose(w_hh.reshape(4, H, H), (2, 0, 1))      # (H, 4, H)
    whh_p = (jnp.zeros((H_p, 4, H_p), compute_dtype)
             .at[:H, :, :H].set(whh_g.astype(compute_dtype))
             .reshape(H_p, 4 * H_p))
    bias = (b_ih + b_hh).astype(jnp.float32).reshape(4, H)
    bias_p = (jnp.zeros((4, H_p), jnp.float32)
              .at[:, :H].set(bias)
              .reshape(1, 4 * H_p))

    # Explicit VMEM budget from the actual block sizes (v5e default scoped
    # limit is only 16 MiB; v7x physical VMEM is 64 MiB).
    isz = jnp.dtype(compute_dtype).itemsize
    vmem_needed = (
        2 * S * B_tile * I_p * isz            # x tile, double-buffered
        + 2 * (I_p + H_p) * 4 * H_p * isz     # W_ih^T + W_hh^T (2 buffers)
        + 2 * 4 * H_p * 4                     # bias
        + 2 * 2 * B_tile * H_p * 4            # h/c outputs (2 buffers each)
        + 2 * C * B_tile * 4 * H_p * 4        # pre-gate double-buffer scratch
    )
    vmem_limit = int(min(max(2 * vmem_needed, 32 << 20), 64 << 20))

    out_shapes = (jax.ShapeDtypeStruct((B_pad, H_p), jnp.float32),
                  jax.ShapeDtypeStruct((B_pad, H_p), jnp.float32))

    # NOTE: at production H the constant-operand specs (W_ih, W_hh, bias) can
    # additionally be marked pipeline_mode=pl.Buffered(1) to avoid
    # double-buffering the resident weights.
    h_full, c_full = pl.pallas_call(
        lstm_kernel,
        out_shape=out_shapes,
        grid_spec=pltpu.PrefetchScalarGridSpec(
            num_scalar_prefetch=0,
            grid=(nb,),  # independent batch tiles -> parallel / megacore-able
            in_specs=[
                pl.BlockSpec((S, B_tile, I_p), lambda b: (0, b, 0)),   # x tile
                pl.BlockSpec((I_p, 4 * H_p), lambda b: (0, 0)),        # W_ih^T
                pl.BlockSpec((H_p, 4 * H_p), lambda b: (0, 0)),        # W_hh^T
                pl.BlockSpec((1, 4 * H_p), lambda b: (0, 0)),          # bias
            ],
            out_specs=[
                pl.BlockSpec((B_tile, H_p), lambda b: (b, 0)),         # hidden
                pl.BlockSpec((B_tile, H_p), lambda b: (b, 0)),         # cell
            ],
            scratch_shapes=[
                pltpu.VMEM((2 * C, B_tile, 4 * H_p), jnp.float32),     # pre
            ],
        ),
        compiler_params=pltpu.CompilerParams(
            dimension_semantics=("parallel",),
            vmem_limit_bytes=vmem_limit),
    )(x_tm, wih_p, whh_p, bias_p)

    hidden = h_full[None, :B, :H].astype(x.dtype)
    cell = c_full[None, :B, :H].astype(x.dtype)
    return hidden, cell


def _lstm_reference(x, w_ih, w_hh, b_ih, b_hh, compute_dtype=jnp.float32):
    """Pure-JAX reference matching torch.nn.LSTM semantics (for validation)."""
    B, S, I = x.shape
    H = w_ih.shape[0] // 4
    cd = compute_dtype
    wih = w_ih.astype(cd)
    whh = w_hh.astype(cd)
    bias = (b_ih + b_hh).astype(jnp.float32)

    def step(carry, x_t):
        h, c = carry
        gates = (jnp.dot(x_t.astype(cd), wih.T, preferred_element_type=jnp.float32)
                 + jnp.dot(h.astype(cd), whh.T, preferred_element_type=jnp.float32)
                 + bias)
        i_g = jax.nn.sigmoid(gates[:, 0 * H:1 * H])
        f_g = jax.nn.sigmoid(gates[:, 1 * H:2 * H])
        g_g = jnp.tanh(gates[:, 2 * H:3 * H])
        o_g = jax.nn.sigmoid(gates[:, 3 * H:4 * H])
        c_new = f_g * c + i_g * g_g
        h_new = o_g * jnp.tanh(c_new)
        return (h_new, c_new), None

    h0 = jnp.zeros((B, H), jnp.float32)
    c0 = jnp.zeros((B, H), jnp.float32)
    (h, c), _ = lax.scan(step, (h0, c0), jnp.transpose(x, (1, 0, 2)))
    return h[None].astype(x.dtype), c[None].astype(x.dtype)


if __name__ == "__main__":
    # Small shapes consistent with the module: batch=2, seq=8, input=16, hidden=32
    B, S, I, H = 2, 8, 16, 32

    key = jax.random.PRNGKey(0)
    kx, k1, k2, k3, k4 = jax.random.split(key, 5)

    # PyTorch LSTM default init: U(-1/sqrt(H), 1/sqrt(H))
    bound = 1.0 / jnp.sqrt(jnp.float32(H))
    w_ih = jax.random.uniform(k1, (4 * H, I), jnp.float32, -bound, bound)
    w_hh = jax.random.uniform(k2, (4 * H, H), jnp.float32, -bound, bound)
    b_ih = jax.random.uniform(k3, (4 * H,), jnp.float32, -bound, bound)
    b_hh = jax.random.uniform(k4, (4 * H,), jnp.float32, -bound, bound)
    x = jax.random.normal(kx, (B, S, I), jnp.float32)

    # Algorithmic check (gate order / bias / padding / recurrence) on the f32
    # path.  Tolerance allows for possible matmul default-precision
    # differences between XLA's dot and the Mosaic-lowered MXU matmul.
    h_ref32, c_ref32 = _lstm_reference(x, w_ih, w_hh, b_ih, b_hh, jnp.float32)
    h32, c32 = encoder_forward(x, w_ih, w_hh, b_ih, b_hh,
                               compute_dtype=jnp.float32)
    jax.block_until_ready((h32, c32))
    assert h32.shape == (1, B, H) and c32.shape == (1, B, H)
    assert jnp.allclose(h32, h_ref32, atol=5e-3, rtol=5e-3)
    assert jnp.allclose(c32, c_ref32, atol=5e-3, rtol=5e-3)

    # Production path: bf16 MXU operands, f32 accumulation and f32 h/c state.
    h_refbf, c_refbf = _lstm_reference(x, w_ih, w_hh, b_ih, b_hh, jnp.bfloat16)
    hbf, cbf = encoder_forward(x, w_ih, w_hh, b_ih, b_hh,
                               compute_dtype=jnp.bfloat16)
    jax.block_until_ready((hbf, cbf))
    assert hbf.shape == (1, B, H) and cbf.shape == (1, B, H)
    assert jnp.allclose(hbf, h_refbf, atol=2e-3, rtol=2e-3)
    assert jnp.allclose(cbf, c_refbf, atol=2e-3, rtol=2e-3)

    print("KERNEL_OK")
</pallas_src>

<mosaic_0001>
module attributes {stable_mosaic.version = 11 : i64} {
  func.func @lstm_kernel(%arg0: i32, %arg1: memref<8x8x128xf32, #tpu.memory_space<vmem>>, %arg2: memref<128x512xf32, #tpu.memory_space<vmem>>, %arg3: memref<128x512xf32, #tpu.memory_space<vmem>>, %arg4: memref<1x512xf32, #tpu.memory_space<vmem>>, %arg5: memref<8x128xf32, #tpu.memory_space<vmem>>, %arg6: memref<8x128xf32, #tpu.memory_space<vmem>>, %arg7: memref<16x8x512xf32, #tpu.memory_space<vmem>>) attributes {dimension_semantics = [#tpu.dimension_semantics<parallel>], iteration_bounds = array<i64: 1>, scalar_prefetch = 0 : i64, scratch_operands = 1 : i64, tpu.core_type = #tpu.core_type<tc>, window_params = [{transform_indices = @transform_0, window_bounds = array<i64: 8, 8, 128>}, {pipeline_mode = #tpu.pipeline_mode<synchronous>, transform_indices = @transform_1, window_bounds = array<i64: 128, 512>}, {pipeline_mode = #tpu.pipeline_mode<synchronous>, transform_indices = @transform_2, window_bounds = array<i64: 128, 512>}, {pipeline_mode = #tpu.pipeline_mode<synchronous>, transform_indices = @transform_3, window_bounds = array<i64: 1, 512>}, {transform_indices = @transform_4, window_bounds = array<i64: 8, 128>}, {transform_indices = @transform_5, window_bounds = array<i64: 8, 128>}]} {
    %cst = arith.constant 0.000000e+00 : f32
    %0 = vector.broadcast %cst : f32 to vector<8x128xf32>
    %cst_0 = arith.constant 0.000000e+00 : f32
    %1 = vector.broadcast %cst_0 : f32 to vector<8x128xf32>
    %c0 = arith.constant 0 : index
    %c0_1 = arith.constant 0 : index
    %c0_2 = arith.constant 0 : index
    %2 = vector.load %arg1[%c0, %c0_1, %c0_2] : memref<8x8x128xf32, #tpu.memory_space<vmem>>, vector<8x8x128xf32>
    %3 = vector.shape_cast %2 : vector<8x8x128xf32> to vector<64x128xf32>
    %c0_3 = arith.constant 0 : index
    %c0_4 = arith.constant 0 : index
    %4 = vector.load %arg2[%c0_3, %c0_4] : memref<128x512xf32, #tpu.memory_space<vmem>>, vector<128x512xf32>
    %cst_5 = arith.constant dense<0.000000e+00> : vector<64x512xf32>
    %5 = tpu.matmul %3, %4, %cst_5 {dimension_numbers = #tpu.dot_dimension_numbers<[1], [0], [0], [1], [0, 0, 1, 1], [], []>} : vector<64x128xf32>, vector<128x512xf32>, vector<64x512xf32> -> vector<64x512xf32>
    %c0_6 = arith.constant 0 : index
    %c0_7 = arith.constant 0 : index
    %6 = vector.load %arg4[%c0_6, %c0_7] : memref<1x512xf32, #tpu.memory_space<vmem>>, vector<1x512xf32>
    %7 = vector.broadcast %6 : vector<1x512xf32> to vector<64x512xf32>
    %8 = arith.addf %5, %7 : vector<64x512xf32>
    %9 = vector.shape_cast %8 : vector<64x512xf32> to vector<8x8x512xf32>
    %c0_8 = arith.constant 0 : index
    %c0_9 = arith.constant 0 : index
    %c0_10 = arith.constant 0 : index
    %10 = vector.load %arg7[%c0_8, %c0_9, %c0_10] : memref<16x8x512xf32, #tpu.memory_space<vmem>>, vector<8x8x512xf32>
    tpu.vector_store %arg7[%c0_8, %c0_9, %c0_10], %9 {strides = array<i32>} : memref<16x8x512xf32, #tpu.memory_space<vmem>>, vector<8x8x512xf32>,
    %c0_i32 = arith.constant 0 : i32
    %c2_i32 = arith.constant 2 : i32
    %11 = arith.remsi %c0_i32, %c2_i32 : i32
    %c8_i32 = arith.constant 8 : i32
    %12 = arith.muli %11, %c8_i32 : i32
    %c0_i32_11 = arith.constant 0 : i32
    %13 = arith.addi %12, %c0_i32_11 : i32
    %14 = arith.index_cast %13 : i32 to index
    %c0_12 = arith.constant 0 : index
    %c0_13 = arith.constant 0 : index
    %15 = vector.load %arg7[%14, %c0_12, %c0_13] : memref<16x8x512xf32, #tpu.memory_space<vmem>>, vector<1x8x512xf32>
    %16 = vector.shape_cast %15 : vector<1x8x512xf32> to vector<8x512xf32>
    %c0_14 = arith.constant 0 : index
    %c0_15 = arith.constant 0 : index
    %17 = vector.load %arg3[%c0_14, %c0_15] : memref<128x512xf32, #tpu.memory_space<vmem>>, vector<128x512xf32>
    %cst_16 = arith.constant dense<0.000000e+00> : vector<8x512xf32>
    %18 = tpu.matmul %0, %17, %cst_16 {dimension_numbers = #tpu.dot_dimension_numbers<[1], [0], [0], [1], [0, 0, 1, 1], [], []>} : vector<8x128xf32>, vector<128x512xf32>, vector<8x512xf32> -> vector<8x512xf32>
    %19 = arith.addf %16, %18 : vector<8x512xf32>
    %20 = vector.extract_strided_slice %19 {offsets = [0, 0], sizes = [8, 128], strides = [1, 1]} : vector<8x512xf32> to vector<8x128xf32>
    %cst_17 = arith.constant 5.000000e-01 : f32
    %21 = vector.broadcast %cst_17 : f32 to vector<8x128xf32>
    %22 = arith.mulf %21, %20 : vector<8x128xf32>
    %23 = math.tanh %22 : vector<8x128xf32>
    %cst_18 = arith.constant 5.000000e-01 : f32
    %24 = vector.broadcast %cst_18 : f32 to vector<8x128xf32>
    %25 = arith.mulf %24, %23 : vector<8x128xf32>
    %cst_19 = arith.constant 5.000000e-01 : f32
    %26 = vector.broadcast %cst_19 : f32 to vector<8x128xf32>
    %27 = arith.addf %25, %26 : vector<8x128xf32>
    %28 = vector.extract_strided_slice %19 {offsets = [0, 128], sizes = [8, 128], strides = [1, 1]} : vector<8x512xf32> to vector<8x128xf32>
    %cst_20 = arith.constant 5.000000e-01 : f32
    %29 = vector.broadcast %cst_20 : f32 to vector<8x128xf32>
    %30 = arith.mulf %29, %28 : vector<8x128xf32>
    %31 = math.tanh %30 : vector<8x128xf32>
    %cst_21 = arith.constant 5.000000e-01 : f32
    %32 = vector.broadcast %cst_21 : f32 to vector<8x128xf32>
    %33 = arith.mulf %32, %31 : vector<8x128xf32>
    %cst_22 = arith.constant 5.000000e-01 : f32
    %34 = vector.broadcast %cst_22 : f32 to vector<8x128xf32>
    %35 = arith.addf %33, %34 : vector<8x128xf32>
    %36 = vector.extract_strided_slice %19 {offsets = [0, 256], sizes = [8, 128], strides = [1, 1]} : vector<8x512xf32> to vector<8x128xf32>
    %37 = math.tanh %36 : vector<8x128xf32>
    %38 = vector.extract_strided_slice %19 {offsets = [0, 384], sizes = [8, 128], strides = [1, 1]} : vector<8x512xf32> to vector<8x128xf32>
    %cst_23 = arith.constant 5.000000e-01 : f32
    %39 = vector.broadcast %cst_23 : f32 to vector<8x128xf32>
    %40 = arith.mulf %39, %38 : vector<8x128xf32>
    %41 = math.tanh %40 : vector<8x128xf32>
    %cst_24 = arith.constant 5.000000e-01 : f32
    %42 = vector.broadcast %cst_24 : f32 to vector<8x128xf32>
    %43 = arith.mulf %42, %41 : vector<8x128xf32>
    %cst_25 = arith.constant 5.000000e-01 : f32
    %44 = vector.broadcast %cst_25 : f32 to vector<8x128xf32>
    %45 = arith.addf %43, %44 : vector<8x128xf32>
    %46 = arith.mulf %35, %1 : vector<8x128xf32>
    %47 = arith.mulf %27, %37 : vector<8x128xf32>
    %48 = arith.addf %46, %47 : vector<8x128xf32>
    %49 = math.tanh %48 : vector<8x128xf32>
    %50 = arith.mulf %45, %49 : vector<8x128xf32>
    %c1_i32 = arith.constant 1 : i32
    %51 = arith.addi %12, %c1_i32 : i32
    %52 = arith.index_cast %51 : i32 to index
    %c0_26 = arith.constant 0 : index
    %c0_27 = arith.constant 0 : index
    %53 = vector.load %arg7[%52, %c0_26, %c0_27] : memref<16x8x512xf32, #tpu.memory_space<vmem>>, vector<1x8x512xf32>
    %54 = vector.shape_cast %53 : vector<1x8x512xf32> to vector<8x512xf32>
    %c0_28 = arith.constant 0 : index
    %c0_29 = arith.constant 0 : index
    %55 = vector.load %arg3[%c0_28, %c0_29] : memref<128x512xf32, #tpu.memory_space<vmem>>, vector<128x512xf32>
    %cst_30 = arith.constant dense<0.000000e+00> : vector<8x512xf32>
    %56 = tpu.matmul %50, %55, %cst_30 {dimension_numbers = #tpu.dot_dimension_numbers<[1], [0], [0], [1], [0, 0, 1, 1], [], []>} : vector<8x128xf32>, vector<128x512xf32>, vector<8x512xf32> -> vector<8x512xf32>
    %57 = arith.addf %54, %56 : vector<8x512xf32>
    %58 = vector.extract_strided_slice %57 {offsets = [0, 0], sizes = [8, 128], strides = [1, 1]} : vector<8x512xf32> to vector<8x128xf32>
    %cst_31 = arith.constant 5.000000e-01 : f32
    %59 = vector.broadcast %cst_31 : f32 to vector<8x128xf32>
    %60 = arith.mulf %59, %58 : vector<8x128xf32>
    %61 = math.tanh %60 : vector<8x128xf32>
    %cst_32 = arith.constant 5.000000e-01 : f32
    %62 = vector.broadcast %cst_32 : f32 to vector<8x128xf32>
    %63 = arith.mulf %62, %61 : vector<8x128xf32>
    %cst_33 = arith.constant 5.000000e-01 : f32
    %64 = vector.broadcast %cst_33 : f32 to vector<8x128xf32>
    %65 = arith.addf %63, %64 : vector<8x128xf32>
    %66 = vector.extract_strided_slice %57 {offsets = [0, 128], sizes = [8, 128], strides = [1, 1]} : vector<8x512xf32> to vector<8x128xf32>
    %cst_34 = arith.constant 5.000000e-01 : f32
    %67 = vector.broadcast %cst_34 : f32 to vector<8x128xf32>
    %68 = arith.mulf %67, %66 : vector<8x128xf32>
    %69 = math.tanh %68 : vector<8x128xf32>
    %cst_35 = arith.constant 5.000000e-01 : f32
    %70 = vector.broadcast %cst_35 : f32 to vector<8x128xf32>
    %71 = arith.mulf %70, %69 : vector<8x128xf32>
    %cst_36 = arith.constant 5.000000e-01 : f32
    %72 = vector.broadcast %cst_36 : f32 to vector<8x128xf32>
    %73 = arith.addf %71, %72 : vector<8x128xf32>
    %74 = vector.extract_strided_slice %57 {offsets = [0, 256], sizes = [8, 128], strides = [1, 1]} : vector<8x512xf32> to vector<8x128xf32>
    %75 = math.tanh %74 : vector<8x128xf32>
    %76 = vector.extract_strided_slice %57 {offsets = [0, 384], sizes = [8, 128], strides = [1, 1]} : vector<8x512xf32> to vector<8x128xf32>
    %cst_37 = arith.constant 5.000000e-01 : f32
    %77 = vector.broadcast %cst_37 : f32 to vector<8x128xf32>
    %78 = arith.mulf %77, %76 : vector<8x128xf32>
    %79 = math.tanh %78 : vector<8x128xf32>
    %cst_38 = arith.constant 5.000000e-01 : f32
    %80 = vector.broadcast %cst_38 : f32 to vector<8x128xf32>
    %81 = arith.mulf %80, %79 : vector<8x128xf32>
    %cst_39 = arith.constant 5.000000e-01 : f32
    %82 = vector.broadcast %cst_39 : f32 to vector<8x128xf32>
    %83 = arith.addf %81, %82 : vector<8x128xf32>
    %84 = arith.mulf %73, %48 : vector<8x128xf32>
    %85 = arith.mulf %65, %75 : vector<8x128xf32>
    %86 = arith.addf %84, %85 : vector<8x128xf32>
    %87 = math.tanh %86 : vector<8x128xf32>
    %88 = arith.mulf %83, %87 : vector<8x128xf32>
    %c2_i32_40 = arith.constant 2 : i32
    %89 = arith.addi %12, %c2_i32_40 : i32
    %90 = arith.index_cast %89 : i32 to index
    %c0_41 = arith.constant 0 : index
    %c0_42 = arith.constant 0 : index
    %91 = vector.load %arg7[%90, %c0_41, %c0_42] : memref<16x8x512xf32, #tpu.memory_space<vmem>>, vector<1x8x512xf32>
    %92 = vector.shape_cast %91 : vector<1x8x512xf32> to vector<8x512xf32>
    %c0_43 = arith.constant 0 : index
    %c0_44 = arith.constant 0 : index
    %93 = vector.load %arg3[%c0_43, %c0_44] : memref<128x512xf32, #tpu.memory_space<vmem>>, vector<128x512xf32>
    %cst_45 = arith.constant dense<0.000000e+00> : vector<8x512xf32>
    %94 = tpu.matmul %88, %93, %cst_45 {dimension_numbers = #tpu.dot_dimension_numbers<[1], [0], [0], [1], [0, 0, 1, 1], [], []>} : vector<8x128xf32>, vector<128x512xf32>, vector<8x512xf32> -> vector<8x512xf32>
    %95 = arith.addf %92, %94 : vector<8x512xf32>
    %96 = vector.extract_strided_slice %95 {offsets = [0, 0], sizes = [8, 128], strides = [1, 1]} : vector<8x512xf32> to vector<8x128xf32>
    %cst_46 = arith.constant 5.000000e-01 : f32
    %97 = vector.broadcast %cst_46 : f32 to vector<8x128xf32>
    %98 = arith.mulf %97, %96 : vector<8x128xf32>
    %99 = math.tanh %98 : vector<8x128xf32>
    %cst_47 = arith.constant 5.000000e-01 : f32
    %100 = vector.broadcast %cst_47 : f32 to vector<8x128xf32>
    %101 = arith.mulf %100, %99 : vector<8x128xf32>
    %cst_48 = arith.constant 5.000000e-01 : f32
    %102 = vector.broadcast %cst_48 : f32 to vector<8x128xf32>
    %103 = arith.addf %101, %102 : vector<8x128xf32>
    %104 = vector.extract_strided_slice %95 {offsets = [0, 128], sizes = [8, 128], strides = [1, 1]} : vector<8x512xf32> to vector<8x128xf32>
    %cst_49 = arith.constant 5.000000e-01 : f32
    %105 = vector.broadcast %cst_49 : f32 to vector<8x128xf32>
    %106 = arith.mulf %105, %104 : vector<8x128xf32>
    %107 = math.tanh %106 : vector<8x128xf32>
    %cst_50 = arith.constant 5.000000e-01 : f32
    %108 = vector.broadcast %cst_50 : f32 to vector<8x128xf32>
    %109 = arith.mulf %108, %107 : vector<8x128xf32>
    %cst_51 = arith.constant 5.000000e-01 : f32
    %110 = vector.broadcast %cst_51 : f32 to vector<8x128xf32>
    %111 = arith.addf %109, %110 : vector<8x128xf32>
    %112 = vector.extract_strided_slice %95 {offsets = [0, 256], sizes = [8, 128], strides = [1, 1]} : vector<8x512xf32> to vector<8x128xf32>
    %113 = math.tanh %112 : vector<8x128xf32>
    %114 = vector.extract_strided_slice %95 {offsets = [0, 384], sizes = [8, 128], strides = [1, 1]} : vector<8x512xf32> to vector<8x128xf32>
    %cst_52 = arith.constant 5.000000e-01 : f32
    %115 = vector.broadcast %cst_52 : f32 to vector<8x128xf32>
    %116 = arith.mulf %115, %114 : vector<8x128xf32>
    %117 = math.tanh %116 : vector<8x128xf32>
    %cst_53 = arith.constant 5.000000e-01 : f32
    %118 = vector.broadcast %cst_53 : f32 to vector<8x128xf32>
    %119 = arith.mulf %118, %117 : vector<8x128xf32>
    %cst_54 = arith.constant 5.000000e-01 : f32
    %120 = vector.broadcast %cst_54 : f32 to vector<8x128xf32>
    %121 = arith.addf %119, %120 : vector<8x128xf32>
    %122 = arith.mulf %111, %86 : vector<8x128xf32>
    %123 = arith.mulf %103, %113 : vector<8x128xf32>
    %124 = arith.addf %122, %123 : vector<8x128xf32>
    %125 = math.tanh %124 : vector<8x128xf32>
    %126 = arith.mulf %121, %125 : vector<8x128xf32>
    %c3_i32 = arith.constant 3 : i32
    %127 = arith.addi %12, %c3_i32 : i32
    %128 = arith.index_cast %127 : i32 to index
    %c0_55 = arith.constant 0 : index
    %c0_56 = arith.constant 0 : index
    %129 = vector.load %arg7[%128, %c0_55, %c0_56] : memref<16x8x512xf32, #tpu.memory_space<vmem>>, vector<1x8x512xf32>
    %130 = vector.shape_cast %129 : vector<1x8x512xf32> to vector<8x512xf32>
    %c0_57 = arith.constant 0 : index
    %c0_58 = arith.constant 0 : index
    %131 = vector.load %arg3[%c0_57, %c0_58] : memref<128x512xf32, #tpu.memory_space<vmem>>, vector<128x512xf32>
    %cst_59 = arith.constant dense<0.000000e+00> : vector<8x512xf32>
    %132 = tpu.matmul %126, %131, %cst_59 {dimension_numbers = #tpu.dot_dimension_numbers<[1], [0], [0], [1], [0, 0, 1, 1], [], []>} : vector<8x128xf32>, vector<128x512xf32>, vector<8x512xf32> -> vector<8x512xf32>
    %133 = arith.addf %130, %132 : vector<8x512xf32>
    %134 = vector.extract_strided_slice %133 {offsets = [0, 0], sizes = [8, 128], strides = [1, 1]} : vector<8x512xf32> to vector<8x128xf32>
    %cst_60 = arith.constant 5.000000e-01 : f32
    %135 = vector.broadcast %cst_60 : f32 to vector<8x128xf32>
    %136 = arith.mulf %135, %134 : vector<8x128xf32>
    %137 = math.tanh %136 : vector<8x128xf32>
    %cst_61 = arith.constant 5.000000e-01 : f32
    %138 = vector.broadcast %cst_61 : f32 to vector<8x128xf32>
    %139 = arith.mulf %138, %137 : vector<8x128xf32>
    %cst_62 = arith.constant 5.000000e-01 : f32
    %140 = vector.broadcast %cst_62 : f32 to vector<8x128xf32>
    %141 = arith.addf %139, %140 : vector<8x128xf32>
    %142 = vector.extract_strided_slice %133 {offsets = [0, 128], sizes = [8, 128], strides = [1, 1]} : vector<8x512xf32> to vector<8x128xf32>
    %cst_63 = arith.constant 5.000000e-01 : f32
    %143 = vector.broadcast %cst_63 : f32 to vector<8x128xf32>
    %144 = arith.mulf %143, %142 : vector<8x128xf32>
    %145 = math.tanh %144 : vector<8x128xf32>
    %cst_64 = arith.constant 5.000000e-01 : f32
    %146 = vector.broadcast %cst_64 : f32 to vector<8x128xf32>
    %147 = arith.mulf %146, %145 : vector<8x128xf32>
    %cst_65 = arith.constant 5.000000e-01 : f32
    %148 = vector.broadcast %cst_65 : f32 to vector<8x128xf32>
    %149 = arith.addf %147, %148 : vector<8x128xf32>
    %150 = vector.extract_strided_slice %133 {offsets = [0, 256], sizes = [8, 128], strides = [1, 1]} : vector<8x512xf32> to vector<8x128xf32>
    %151 = math.tanh %150 : vector<8x128xf32>
    %152 = vector.extract_strided_slice %133 {offsets = [0, 384], sizes = [8, 128], strides = [1, 1]} : vector<8x512xf32> to vector<8x128xf32>
    %cst_66 = arith.constant 5.000000e-01 : f32
    %153 = vector.broadcast %cst_66 : f32 to vector<8x128xf32>
    %154 = arith.mulf %153, %152 : vector<8x128xf32>
    %155 = math.tanh %154 : vector<8x128xf32>
    %cst_67 = arith.constant 5.000000e-01 : f32
    %156 = vector.broadcast %cst_67 : f32 to vector<8x128xf32>
    %157 = arith.mulf %156, %155 : vector<8x128xf32>
    %cst_68 = arith.constant 5.000000e-01 : f32
    %158 = vector.broadcast %cst_68 : f32 to vector<8x128xf32>
    %159 = arith.addf %157, %158 : vector<8x128xf32>
    %160 = arith.mulf %149, %124 : vector<8x128xf32>
    %161 = arith.mulf %141, %151 : vector<8x128xf32>
    %162 = arith.addf %160, %161 : vector<8x128xf32>
    %163 = math.tanh %162 : vector<8x128xf32>
    %164 = arith.mulf %159, %163 : vector<8x128xf32>
    %c4_i32 = arith.constant 4 : i32
    %165 = arith.addi %12, %c4_i32 : i32
    %166 = arith.index_cast %165 : i32 to index
    %c0_69 = arith.constant 0 : index
    %c0_70 = arith.constant 0 : index
    %167 = vector.load %arg7[%166, %c0_69, %c0_70] : memref<16x8x512xf32, #tpu.memory_space<vmem>>, vector<1x8x512xf32>
    %168 = vector.shape_cast %167 : vector<1x8x512xf32> to vector<8x512xf32>
    %c0_71 = arith.constant 0 : index
    %c0_72 = arith.constant 0 : index
    %169 = vector.load %arg3[%c0_71, %c0_72] : memref<128x512xf32, #tpu.memory_space<vmem>>, vector<128x512xf32>
    %cst_73 = arith.constant dense<0.000000e+00> : vector<8x512xf32>
    %170 = tpu.matmul %164, %169, %cst_73 {dimension_numbers = #tpu.dot_dimension_numbers<[1], [0], [0], [1], [0, 0, 1, 1], [], []>} : vector<8x128xf32>, vector<128x512xf32>, vector<8x512xf32> -> vector<8x512xf32>
    %171 = arith.addf %168, %170 : vector<8x512xf32>
    %172 = vector.extract_strided_slice %171 {offsets = [0, 0], sizes = [8, 128], strides = [1, 1]} : vector<8x512xf32> to vector<8x128xf32>
    %cst_74 = arith.constant 5.000000e-01 : f32
    %173 = vector.broadcast %cst_74 : f32 to vector<8x128xf32>
    %174 = arith.mulf %173, %172 : vector<8x128xf32>
    %175 = math.tanh %174 : vector<8x128xf32>
    %cst_75 = arith.constant 5.000000e-01 : f32
    %176 = vector.broadcast %cst_75 : f32 to vector<8x128xf32>
    %177 = arith.mulf %176, %175 : vector<8x128xf32>
    %cst_76 = arith.constant 5.000000e-01 : f32
    %178 = vector.broadcast %cst_76 : f32 to vector<8x128xf32>
    %179 = arith.addf %177, %178 : vector<8x128xf32>
    %180 = vector.extract_strided_slice %171 {offsets = [0, 128], sizes = [8, 128], strides = [1, 1]} : vector<8x512xf32> to vector<8x128xf32>
    %cst_77 = arith.constant 5.000000e-01 : f32
    %181 = vector.broadcast %cst_77 : f32 to vector<8x128xf32>
    %182 = arith.mulf %181, %180 : vector<8x128xf32>
    %183 = math.tanh %182 : vector<8x128xf32>
    %cst_78 = arith.constant 5.000000e-01 : f32
    %184 = vector.broadcast %cst_78 : f32 to vector<8x128xf32>
    %185 = arith.mulf %184, %183 : vector<8x128xf32>
    %cst_79 = arith.constant 5.000000e-01 : f32
    %186 = vector.broadcast %cst_79 : f32 to vector<8x128xf32>
    %187 = arith.addf %185, %186 : vector<8x128xf32>
    %188 = vector.extract_strided_slice %171 {offsets = [0, 256], sizes = [8, 128], strides = [1, 1]} : vector<8x512xf32> to vector<8x128xf32>
    %189 = math.tanh %188 : vector<8x128xf32>
    %190 = vector.extract_strided_slice %171 {offsets = [0, 384], sizes = [8, 128], strides = [1, 1]} : vector<8x512xf32> to vector<8x128xf32>
    %cst_80 = arith.constant 5.000000e-01 : f32
    %191 = vector.broadcast %cst_80 : f32 to vector<8x128xf32>
    %192 = arith.mulf %191, %190 : vector<8x128xf32>
    %193 = math.tanh %192 : vector<8x128xf32>
    %cst_81 = arith.constant 5.000000e-01 : f32
    %194 = vector.broadcast %cst_81 : f32 to vector<8x128xf32>
    %195 = arith.mulf %194, %193 : vector<8x128xf32>
    %cst_82 = arith.constant 5.000000e-01 : f32
    %196 = vector.broadcast %cst_82 : f32 to vector<8x128xf32>
    %197 = arith.addf %195, %196 : vector<8x128xf32>
    %198 = arith.mulf %187, %162 : vector<8x128xf32>
    %199 = arith.mulf %179, %189 : vector<8x128xf32>
    %200 = arith.addf %198, %199 : vector<8x128xf32>
    %201 = math.tanh %200 : vector<8x128xf32>
    %202 = arith.mulf %197, %201 : vector<8x128xf32>
    %c5_i32 = arith.constant 5 : i32
    %203 = arith.addi %12, %c5_i32 : i32
    %204 = arith.index_cast %203 : i32 to index
    %c0_83 = arith.constant 0 : index
    %c0_84 = arith.constant 0 : index
    %205 = vector.load %arg7[%204, %c0_83, %c0_84] : memref<16x8x512xf32, #tpu.memory_space<vmem>>, vector<1x8x512xf32>
    %206 = vector.shape_cast %205 : vector<1x8x512xf32> to vector<8x512xf32>
    %c0_85 = arith.constant 0 : index
    %c0_86 = arith.constant 0 : index
    %207 = vector.load %arg3[%c0_85, %c0_86] : memref<128x512xf32, #tpu.memory_space<vmem>>, vector<128x512xf32>
    %cst_87 = arith.constant dense<0.000000e+00> : vector<8x512xf32>
    %208 = tpu.matmul %202, %207, %cst_87 {dimension_numbers = #tpu.dot_dimension_numbers<[1], [0], [0], [1], [0, 0, 1, 1], [], []>} : vector<8x128xf32>, vector<128x512xf32>, vector<8x512xf32> -> vector<8x512xf32>
    %209 = arith.addf %206, %208 : vector<8x512xf32>
    %210 = vector.extract_strided_slice %209 {offsets = [0, 0], sizes = [8, 128], strides = [1, 1]} : vector<8x512xf32> to vector<8x128xf32>
    %cst_88 = arith.constant 5.000000e-01 : f32
    %211 = vector.broadcast %cst_88 : f32 to vector<8x128xf32>
    %212 = arith.mulf %211, %210 : vector<8x128xf32>
    %213 = math.tanh %212 : vector<8x128xf32>
    %cst_89 = arith.constant 5.000000e-01 : f32
    %214 = vector.broadcast %cst_89 : f32 to vector<8x128xf32>
    %215 = arith.mulf %214, %213 : vector<8x128xf32>
    %cst_90 = arith.constant 5.000000e-01 : f32
    %216 = vector.broadcast %cst_90 : f32 to vector<8x128xf32>
    %217 = arith.addf %215, %216 : vector<8x128xf32>
    %218 = vector.extract_strided_slice %209 {offsets = [0, 128], sizes = [8, 128], strides = [1, 1]} : vector<8x512xf32> to vector<8x128xf32>
    %cst_91 = arith.constant 5.000000e-01 : f32
    %219 = vector.broadcast %cst_91 : f32 to vector<8x128xf32>
    %220 = arith.mulf %219, %218 : vector<8x128xf32>
    %221 = math.tanh %220 : vector<8x128xf32>
    %cst_92 = arith.constant 5.000000e-01 : f32
    %222 = vector.broadcast %cst_92 : f32 to vector<8x128xf32>
    %223 = arith.mulf %222, %221 : vector<8x128xf32>
    %cst_93 = arith.constant 5.000000e-01 : f32
    %224 = vector.broadcast %cst_93 : f32 to vector<8x128xf32>
    %225 = arith.addf %223, %224 : vector<8x128xf32>
    %226 = vector.extract_strided_slice %209 {offsets = [0, 256], sizes = [8, 128], strides = [1, 1]} : vector<8x512xf32> to vector<8x128xf32>
    %227 = math.tanh %226 : vector<8x128xf32>
    %228 = vector.extract_strided_slice %209 {offsets = [0, 384], sizes = [8, 128], strides = [1, 1]} : vector<8x512xf32> to vector<8x128xf32>
    %cst_94 = arith.constant 5.000000e-01 : f32
    %229 = vector.broadcast %cst_94 : f32 to vector<8x128xf32>
    %230 = arith.mulf %229, %228 : vector<8x128xf32>
    %231 = math.tanh %230 : vector<8x128xf32>
    %cst_95 = arith.constant 5.000000e-01 : f32
    %232 = vector.broadcast %cst_95 : f32 to vector<8x128xf32>
    %233 = arith.mulf %232, %231 : vector<8x128xf32>
    %cst_96 = arith.constant 5.000000e-01 : f32
    %234 = vector.broadcast %cst_96 : f32 to vector<8x128xf32>
    %235 = arith.addf %233, %234 : vector<8x128xf32>
    %236 = arith.mulf %225, %200 : vector<8x128xf32>
    %237 = arith.mulf %217, %227 : vector<8x128xf32>
    %238 = arith.addf %236, %237 : vector<8x128xf32>
    %239 = math.tanh %238 : vector<8x128xf32>
    %240 = arith.mulf %235, %239 : vector<8x128xf32>
    %c6_i32 = arith.constant 6 : i32
    %241 = arith.addi %12, %c6_i32 : i32
    %242 = arith.index_cast %241 : i32 to index
    %c0_97 = arith.constant 0 : index
    %c0_98 = arith.constant 0 : index
    %243 = vector.load %arg7[%242, %c0_97, %c0_98] : memref<16x8x512xf32, #tpu.memory_space<vmem>>, vector<1x8x512xf32>
    %244 = vector.shape_cast %243 : vector<1x8x512xf32> to vector<8x512xf32>
    %c0_99 = arith.constant 0 : index
    %c0_100 = arith.constant 0 : index
    %245 = vector.load %arg3[%c0_99, %c0_100] : memref<128x512xf32, #tpu.memory_space<vmem>>, vector<128x512xf32>
    %cst_101 = arith.constant dense<0.000000e+00> : vector<8x512xf32>
    %246 = tpu.matmul %240, %245, %cst_101 {dimension_numbers = #tpu.dot_dimension_numbers<[1], [0], [0], [1], [0, 0, 1, 1], [], []>} : vector<8x128xf32>, vector<128x512xf32>, vector<8x512xf32> -> vector<8x512xf32>
    %247 = arith.addf %244, %246 : vector<8x512xf32>
    %248 = vector.extract_strided_slice %247 {offsets = [0, 0], sizes = [8, 128], strides = [1, 1]} : vector<8x512xf32> to vector<8x128xf32>
    %cst_102 = arith.constant 5.000000e-01 : f32
    %249 = vector.broadcast %cst_102 : f32 to vector<8x128xf32>
    %250 = arith.mulf %249, %248 : vector<8x128xf32>
    %251 = math.tanh %250 : vector<8x128xf32>
    %cst_103 = arith.constant 5.000000e-01 : f32
    %252 = vector.broadcast %cst_103 : f32 to vector<8x128xf32>
    %253 = arith.mulf %252, %251 : vector<8x128xf32>
    %cst_104 = arith.constant 5.000000e-01 : f32
    %254 = vector.broadcast %cst_104 : f32 to vector<8x128xf32>
    %255 = arith.addf %253, %254 : vector<8x128xf32>
    %256 = vector.extract_strided_slice %247 {offsets = [0, 128], sizes = [8, 128], strides = [1, 1]} : vector<8x512xf32> to vector<8x128xf32>
    %cst_105 = arith.constant 5.000000e-01 : f32
    %257 = vector.broadcast %cst_105 : f32 to vector<8x128xf32>
    %258 = arith.mulf %257, %256 : vector<8x128xf32>
    %259 = math.tanh %258 : vector<8x128xf32>
    %cst_106 = arith.constant 5.000000e-01 : f32
    %260 = vector.broadcast %cst_106 : f32 to vector<8x128xf32>
    %261 = arith.mulf %260, %259 : vector<8x128xf32>
    %cst_107 = arith.constant 5.000000e-01 : f32
    %262 = vector.broadcast %cst_107 : f32 to vector<8x128xf32>
    %263 = arith.addf %261, %262 : vector<8x128xf32>
    %264 = vector.extract_strided_slice %247 {offsets = [0, 256], sizes = [8, 128], strides = [1, 1]} : vector<8x512xf32> to vector<8x128xf32>
    %265 = math.tanh %264 : vector<8x128xf32>
    %266 = vector.extract_strided_slice %247 {offsets = [0, 384], sizes = [8, 128], strides = [1, 1]} : vector<8x512xf32> to vector<8x128xf32>
    %cst_108 = arith.constant 5.000000e-01 : f32
    %267 = vector.broadcast %cst_108 : f32 to vector<8x128xf32>
    %268 = arith.mulf %267, %266 : vector<8x128xf32>
    %269 = math.tanh %268 : vector<8x128xf32>
    %cst_109 = arith.constant 5.000000e-01 : f32
    %270 = vector.broadcast %cst_109 : f32 to vector<8x128xf32>
    %271 = arith.mulf %270, %269 : vector<8x128xf32>
    %cst_110 = arith.constant 5.000000e-01 : f32
    %272 = vector.broadcast %cst_110 : f32 to vector<8x128xf32>
    %273 = arith.addf %271, %272 : vector<8x128xf32>
    %274 = arith.mulf %263, %238 : vector<8x128xf32>
    %275 = arith.mulf %255, %265 : vector<8x128xf32>
    %276 = arith.addf %274, %275 : vector<8x128xf32>
    %277 = math.tanh %276 : vector<8x128xf32>
    %278 = arith.mulf %273, %277 : vector<8x128xf32>
    %c7_i32 = arith.constant 7 : i32
    %279 = arith.addi %12, %c7_i32 : i32
    %280 = arith.index_cast %279 : i32 to index
    %c0_111 = arith.constant 0 : index
    %c0_112 = arith.constant 0 : index
    %281 = vector.load %arg7[%280, %c0_111, %c0_112] : memref<16x8x512xf32, #tpu.memory_space<vmem>>, vector<1x8x512xf32>
    %282 = vector.shape_cast %281 : vector<1x8x512xf32> to vector<8x512xf32>
    %c0_113 = arith.constant 0 : index
    %c0_114 = arith.constant 0 : index
    %283 = vector.load %arg3[%c0_113, %c0_114] : memref<128x512xf32, #tpu.memory_space<vmem>>, vector<128x512xf32>
    %cst_115 = arith.constant dense<0.000000e+00> : vector<8x512xf32>
    %284 = tpu.matmul %278, %283, %cst_115 {dimension_numbers = #tpu.dot_dimension_numbers<[1], [0], [0], [1], [0, 0, 1, 1], [], []>} : vector<8x128xf32>, vector<128x512xf32>, vector<8x512xf32> -> vector<8x512xf32>
    %285 = arith.addf %282, %284 : vector<8x512xf32>
    %286 = vector.extract_strided_slice %285 {offsets = [0, 0], sizes = [8, 128], strides = [1, 1]} : vector<8x512xf32> to vector<8x128xf32>
    %cst_116 = arith.constant 5.000000e-01 : f32
    %287 = vector.broadcast %cst_116 : f32 to vector<8x128xf32>
    %288 = arith.mulf %287, %286 : vector<8x128xf32>
    %289 = math.tanh %288 : vector<8x128xf32>
    %cst_117 = arith.constant 5.000000e-01 : f32
    %290 = vector.broadcast %cst_117 : f32 to vector<8x128xf32>
    %291 = arith.mulf %290, %289 : vector<8x128xf32>
    %cst_118 = arith.constant 5.000000e-01 : f32
    %292 = vector.broadcast %cst_118 : f32 to vector<8x128xf32>
    %293 = arith.addf %291, %292 : vector<8x128xf32>
    %294 = vector.extract_strided_slice %285 {offsets = [0, 128], sizes = [8, 128], strides = [1, 1]} : vector<8x512xf32> to vector<8x128xf32>
    %cst_119 = arith.constant 5.000000e-01 : f32
    %295 = vector.broadcast %cst_119 : f32 to vector<8x128xf32>
    %296 = arith.mulf %295, %294 : vector<8x128xf32>
    %297 = math.tanh %296 : vector<8x128xf32>
    %cst_120 = arith.constant 5.000000e-01 : f32
    %298 = vector.broadcast %cst_120 : f32 to vector<8x128xf32>
    %299 = arith.mulf %298, %297 : vector<8x128xf32>
    %cst_121 = arith.constant 5.000000e-01 : f32
    %300 = vector.broadcast %cst_121 : f32 to vector<8x128xf32>
    %301 = arith.addf %299, %300 : vector<8x128xf32>
    %302 = vector.extract_strided_slice %285 {offsets = [0, 256], sizes = [8, 128], strides = [1, 1]} : vector<8x512xf32> to vector<8x128xf32>
    %303 = math.tanh %302 : vector<8x128xf32>
    %304 = vector.extract_strided_slice %285 {offsets = [0, 384], sizes = [8, 128], strides = [1, 1]} : vector<8x512xf32> to vector<8x128xf32>
    %cst_122 = arith.constant 5.000000e-01 : f32
    %305 = vector.broadcast %cst_122 : f32 to vector<8x128xf32>
    %306 = arith.mulf %305, %304 : vector<8x128xf32>
    %307 = math.tanh %306 : vector<8x128xf32>
    %cst_123 = arith.constant 5.000000e-01 : f32
    %308 = vector.broadcast %cst_123 : f32 to vector<8x128xf32>
    %309 = arith.mulf %308, %307 : vector<8x128xf32>
    %cst_124 = arith.constant 5.000000e-01 : f32
    %310 = vector.broadcast %cst_124 : f32 to vector<8x128xf32>
    %311 = arith.addf %309, %310 : vector<8x128xf32>
    %312 = arith.mulf %301, %276 : vector<8x128xf32>
    %313 = arith.mulf %293, %303 : vector<8x128xf32>
    %314 = arith.addf %312, %313 : vector<8x128xf32>
    %315 = math.tanh %314 : vector<8x128xf32>
    %316 = arith.mulf %311, %315 : vector<8x128xf32>
    %c8_i32_125 = arith.constant 8 : i32
    %c1_i32_126 = arith.constant 1 : i32
    %c0_127 = arith.constant 0 : index
    %c0_128 = arith.constant 0 : index
    %317 = vector.load %arg5[%c0_127, %c0_128] : memref<8x128xf32, #tpu.memory_space<vmem>>, vector<8x128xf32>
    tpu.vector_store %arg5[%c0_127, %c0_128], %316 {strides = array<i32>} : memref<8x128xf32, #tpu.memory_space<vmem>>, vector<8x128xf32>,
    %c0_129 = arith.constant 0 : index
    %c0_130 = arith.constant 0 : index
    %318 = vector.load %arg6[%c0_129, %c0_130] : memref<8x128xf32, #tpu.memory_space<vmem>>, vector<8x128xf32>
    tpu.vector_store %arg6[%c0_129, %c0_130], %314 {strides = array<i32>} : memref<8x128xf32, #tpu.memory_space<vmem>>, vector<8x128xf32>,
    return
  }
  func.func @transform_0(%arg0: i32) -> (i32, i32, i32) {
    %c0_i32 = arith.constant 0 : i32
    %c0_i32_0 = arith.constant 0 : i32
    %c0_i32_1 = arith.constant 0 : i32
    return %c0_i32, %arg0, %c0_i32_0 : i32, i32, i32
  }
  func.func @transform_1(%arg0: i32) -> (i32, i32) {
    %c0_i32 = arith.constant 0 : i32
    %c0_i32_0 = arith.constant 0 : i32
    %c0_i32_1 = arith.constant 0 : i32
    return %c0_i32, %c0_i32_0 : i32, i32
  }
  func.func @transform_2(%arg0: i32) -> (i32, i32) {
    %c0_i32 = arith.constant 0 : i32
    %c0_i32_0 = arith.constant 0 : i32
    %c0_i32_1 = arith.constant 0 : i32
    return %c0_i32, %c0_i32_0 : i32, i32
  }
  func.func @transform_3(%arg0: i32) -> (i32, i32) {
    %c0_i32 = arith.constant 0 : i32
    %c0_i32_0 = arith.constant 0 : i32
    %c0_i32_1 = arith.constant 0 : i32
    return %c0_i32, %c0_i32_0 : i32, i32
  }
  func.func @transform_4(%arg0: i32) -> (i32, i32) {
    %c0_i32 = arith.constant 0 : i32
    %c0_i32_0 = arith.constant 0 : i32
    return %arg0, %c0_i32 : i32, i32
  }
  func.func @transform_5(%arg0: i32) -> (i32, i32) {
    %c0_i32 = arith.constant 0 : i32
    %c0_i32_0 = arith.constant 0 : i32
    return %arg0, %c0_i32 : i32, i32
  }
}

</mosaic_0001>

<llo_original>
// kernel: tpu_custom_call.1
$region0: #{tpu_custom_call.1}
  #allocation0 [shape = 'u32[]', space=smem, size = 0x4, offset = 0x4, fixed_abs, tag = 'smem constant byte address 0x4 - core index']
  #allocation1 [shape = 'u32[144,128]{1,0:T(1,128)}', space=vmem, size = 0x12000, scoped, tag = 'internal scratch']
  #allocation2 [shape = 'f32[16,8,512]{2,1,0:T(8,128)}', space=vmem, size = 0x40000, scoped, tag = 'scratch operand']
  %s0 = inlined_call_operand.hbm [shape: f32[8,8,128], index: 0, kind: input, shape index: {}]
  %s1 = inlined_call_operand.hbm [shape: f32[128,512], index: 1, kind: input, shape index: {}]
  %s2 = inlined_call_operand.hbm [shape: f32[128,512], index: 2, kind: input, shape index: {}]
  %s3 = inlined_call_operand.vmem [shape: f32[1,512], index: 3, kind: input, shape index: {}]
  %s4 = inlined_call_operand.hbm [shape: f32[8,128], index: 4, kind: output, shape index: {0}]
  %s5 = inlined_call_operand.hbm [shape: f32[8,128], index: 5, kind: output, shape index: {1}]
  %6 = xla_tuple %s4, %s5
  %s7 = sld [smem:[#allocation0]]
  $region46: #{tpu_custom_call.1} parent=0
    _
  %s9 = ssub.s32 1, %s7
  %s10 = scalar_select 0, %s9, %s7
  $region1: #{tpu_custom_call.1} parent=0
    #allocation3 [shape = 'u8[32768]{0}', space=vmem, size = 0x8000, scoped, tag = 'input window, operand 0, single buffered']
    #allocation4 [shape = 's32[1]{0}', space=sflag, size = 0x4, scoped, tag = 'scoped memory for tpu_custom_call.1']
    #allocation5 [shape = 's32[1]{0}', space=sflag, size = 0x4, scoped, tag = 'scoped memory for tpu_custom_call.1']
    #allocation6 [shape = 'u8[262144]{0}', space=vmem, size = 0x40000, scoped, tag = 'input window, operand 1, single buffered']
    #allocation7 [shape = 's32[1]{0}', space=sflag, size = 0x4, scoped, tag = 'scoped memory for tpu_custom_call.1']
    #allocation8 [shape = 'u8[262144]{0}', space=vmem, size = 0x40000, scoped, tag = 'input window, operand 2, single buffered']
    #allocation9 [shape = 'u8[4096]{0}', space=vmem, size = 0x1000, scoped, tag = 'output window, operand 0, single buffered']
    #allocation10 [shape = 'u8[4096]{0}', space=vmem, size = 0x1000, scoped, tag = 'output window, operand 1, single buffered']
    #allocation11 [shape = 's32[1]{0}', space=sflag, size = 0x4, scoped, tag = 'scoped memory for tpu_custom_call.1']
    %11 = vsyncpa [#allocation4], 0
    %12 = vsyncpa [#allocation7], 0
    %13 = vsyncpa [#allocation5], 0
    %14 = vsyncpa [#allocation11], 0
    // Predicated region
    $region2: #{tpu_custom_call.1} parent=1 // pred_check
      _
    $region3: #{tpu_custom_call.1} parent=1 // pred_check_branch
      %16 = sbr.rel (0) target = $region5
    $region4: #{tpu_custom_call.1} parent=1 // pred_region
      %s18 = ssub.s32 1024, 1024
      %19 = vsyncadd [#allocation4], %s18
      %s20 = sshll.u32 [#allocation3], 4
      %s21 = int_to_ptr.vmem [resolvable:$true] %s20
      %26 = dma.hbm_to_vmem [thread:$0]  %s0, 1024, %s21, [#allocation4], 128, 128, 8
    $region5: #{tpu_custom_call.1} parent=1 // pred_fallthru
      _
    // Predicated region
    $region6: #{tpu_custom_call.1} parent=1 // pred_check
      _
    $region7: #{tpu_custom_call.1} parent=1 // pred_check_branch
      %28 = sbr.rel (0) target = $region9
    $region8: #{tpu_custom_call.1} parent=1 // pred_region
      %s30 = ssub.s32 8192, 8192
      %31 = vsyncadd [#allocation7], %s30
      %s32 = sshll.u32 [#allocation6], 4
      %s33 = int_to_ptr.vmem [resolvable:$true] %s32
      %38 = dma.hbm_to_vmem [thread:$0]  %s1, 8192, %s33, [#allocation7], 512, 512, 32
    $region9: #{tpu_custom_call.1} parent=1 // pred_fallthru
      _
    // Predicated region
    $region10: #{tpu_custom_call.1} parent=1 // pred_check
      _
    $region11: #{tpu_custom_call.1} parent=1 // pred_check_branch
      %40 = sbr.rel (0) target = $region13
    $region12: #{tpu_custom_call.1} parent=1 // pred_region
      %s42 = ssub.s32 8192, 8192
      %43 = vsyncadd [#allocation7], %s42
      %s44 = sshll.u32 [#allocation8], 4
      %s45 = int_to_ptr.vmem [resolvable:$true] %s44
      %50 = dma.hbm_to_vmem [thread:$0]  %s2, 8192, %s45, [#allocation7], 512, 512, 32
    $region13: #{tpu_custom_call.1} parent=1 // pred_fallthru
      _
    // Predicated region
    $region14: #{tpu_custom_call.1} parent=1 // pred_check
      _
    $region15: #{tpu_custom_call.1} parent=1 // pred_check_branch
      %52 = sbr.rel (0) target = $region17
    $region16: #{tpu_custom_call.1} parent=1 // pred_region
      _
    $region17: #{tpu_custom_call.1} parent=1 // pred_fallthru
      _
    // Predicated region
    $region18: #{tpu_custom_call.1} parent=1 // pred_check
      _
    $region19: #{tpu_custom_call.1} parent=1 // pred_check_branch
      %54 = sbr.rel (0) target = $region21
    $region20: #{tpu_custom_call.1} parent=1 // pred_region
      %55 = dma.done [#allocation4], 1024
    $region21: #{tpu_custom_call.1} parent=1 // pred_fallthru
      _
    // Predicated region
    $region22: #{tpu_custom_call.1} parent=1 // pred_check
      _
    $region23: #{tpu_custom_call.1} parent=1 // pred_check_branch
      %57 = sbr.rel (0) target = $region25
    $region24: #{tpu_custom_call.1} parent=1 // pred_region
      %58 = dma.done [#allocation7], 8192
    $region25: #{tpu_custom_call.1} parent=1 // pred_fallthru
      _
    // Predicated region
    $region26: #{tpu_custom_call.1} parent=1 // pred_check
      _
    $region27: #{tpu_custom_call.1} parent=1 // pred_check_branch
      %60 = sbr.rel (0) target = $region29
    $region28: #{tpu_custom_call.1} parent=1 // pred_region
      %61 = dma.done [#allocation7], 8192
    $region29: #{tpu_custom_call.1} parent=1 // pred_fallthru
      _
    %v62 = vld [vmem:[#allocation3] sm:$0xff]
    %v63 = vld [vmem:[#allocation3 + $0x8] sm:$0xff]
    %v64 = vld [vmem:[#allocation3 + $0x10] sm:$0xff]
    %v65 = vld [vmem:[#allocation3 + $0x18] sm:$0xff]
    %v66 = vld [vmem:[#allocation3 + $0x20] sm:$0xff]
    %v67 = vld [vmem:[#allocation3 + $0x28] sm:$0xff]
    %v68 = vld [vmem:[#allocation3 + $0x30] sm:$0xff]
    %v69 = vld [vmem:[#allocation3 + $0x38] sm:$0xff]
    %v70 = vld [vmem:[#allocation6] sm:$0xff]
    %v71 = vld [vmem:[#allocation6 + $0x8] sm:$0xff]
    %v72 = vld [vmem:[#allocation6 + $0x10] sm:$0xff]
    %v73 = vld [vmem:[#allocation6 + $0x18] sm:$0xff]
    %v74 = vld [vmem:[#allocation6 + $0x20] sm:$0xff]
    %v75 = vld [vmem:[#allocation6 + $0x28] sm:$0xff]
    %v76 = vld [vmem:[#allocation6 + $0x30] sm:$0xff]
    %v77 = vld [vmem:[#allocation6 + $0x38] sm:$0xff]
    %v78 = vld [vmem:[#allocation6 + $0x40] sm:$0xff]
    %v79 = vld [vmem:[#allocation6 + $0x48] sm:$0xff]
    %v80 = vld [vmem:[#allocation6 + $0x50] sm:$0xff]
    %v81 = vld [vmem:[#allocation6 + $0x58] sm:$0xff]
    %v82 = vld [vmem:[#allocation6 + $0x60] sm:$0xff]
    %v83 = vld [vmem:[#allocation6 + $0x68] sm:$0xff]
    %v84 = vld [vmem:[#allocation6 + $0x70] sm:$0xff]
    %v85 = vld [vmem:[#allocation6 + $0x78] sm:$0xff]
    %v86 = vld [vmem:[#allocation6 + $0x80] sm:$0xff]
    %v87 = vld [vmem:[#allocation6 + $0x88] sm:$0xff]
    %v88 = vld [vmem:[#allocation6 + $0x90] sm:$0xff]
    %v89 = vld [vmem:[#allocation6 + $0x98] sm:$0xff]
    %v90 = vld [vmem:[#allocation6 + $0xa0] sm:$0xff]
    %v91 = vld [vmem:[#allocation6 + $0xa8] sm:$0xff]
    %v92 = vld [vmem:[#allocation6 + $0xb0] sm:$0xff]
    %v93 = vld [vmem:[#allocation6 + $0xb8] sm:$0xff]
    %v94 = vld [vmem:[#allocation6 + $0xc0] sm:$0xff]
    %v95 = vld [vmem:[#allocation6 + $0xc8] sm:$0xff]
    %v96 = vld [vmem:[#allocation6 + $0xd0] sm:$0xff]
    %v97 = vld [vmem:[#allocation6 + $0xd8] sm:$0xff]
    %v98 = vld [vmem:[#allocation6 + $0xe0] sm:$0xff]
    %v99 = vld [vmem:[#allocation6 + $0xe8] sm:$0xff]
    %v100 = vld [vmem:[#allocation6 + $0xf0] sm:$0xff]
    %v101 = vld [vmem:[#allocation6 + $0xf8] sm:$0xff]
    %v102 = vld [vmem:[#allocation6 + $0x100] sm:$0xff]
    %v103 = vld [vmem:[#allocation6 + $0x108] sm:$0xff]
    %v104 = vld [vmem:[#allocation6 + $0x110] sm:$0xff]
    %v105 = vld [vmem:[#allocation6 + $0x118] sm:$0xff]
    %v106 = vld [vmem:[#allocation6 + $0x120] sm:$0xff]
    %v107 = vld [vmem:[#allocation6 + $0x128] sm:$0xff]
    %v108 = vld [vmem:[#allocation6 + $0x130] sm:$0xff]
    %v109 = vld [vmem:[#allocation6 + $0x138] sm:$0xff]
    %v110 = vld [vmem:[#allocation6 + $0x140] sm:$0xff]
    %v111 = vld [vmem:[#allocation6 + $0x148] sm:$0xff]
    %v112 = vld [vmem:[#allocation6 + $0x150] sm:$0xff]
    %v113 = vld [vmem:[#allocation6 + $0x158] sm:$0xff]
    %v114 = vld [vmem:[#allocation6 + $0x160] sm:$0xff]
    %v115 = vld [vmem:[#allocation6 + $0x168] sm:$0xff]
    %v116 = vld [vmem:[#allocation6 + $0x170] sm:$0xff]
    %v117 = vld [vmem:[#allocation6 + $0x178] sm:$0xff]
    %v118 = vld [vmem:[#allocation6 + $0x180] sm:$0xff]
    %v119 = vld [vmem:[#allocation6 + $0x188] sm:$0xff]
    %v120 = vld [vmem:[#allocation6 + $0x190] sm:$0xff]
    %v121 = vld [vmem:[#allocation6 + $0x198] sm:$0xff]
    %v122 = vld [vmem:[#allocation6 + $0x1a0] sm:$0xff]
    %v123 = vld [vmem:[#allocation6 + $0x1a8] sm:$0xff]
    %v124 = vld [vmem:[#allocation6 + $0x1b0] sm:$0xff]
    %v125 = vld [vmem:[#allocation6 + $0x1b8] sm:$0xff]
    %v126 = vld [vmem:[#allocation6 + $0x1c0] sm:$0xff]
    %v127 = vld [vmem:[#allocation6 + $0x1c8] sm:$0xff]
    %v128 = vld [vmem:[#allocation6 + $0x1d0] sm:$0xff]
    %v129 = vld [vmem:[#allocation6 + $0x1d8] sm:$0xff]
    %v130 = vld [vmem:[#allocation6 + $0x1e0] sm:$0xff]
    %v131 = vld [vmem:[#allocation6 + $0x1e8] sm:$0xff]
    %v132 = vld [vmem:[#allocation6 + $0x1f0] sm:$0xff]
    %v133 = vld [vmem:[#allocation6 + $0x1f8] sm:$0xff]
    %v134 = vld [vmem:[%s3] sm:$0xf]
    %v136 = vlaneseq
    %v137 = vshrl.u32 %v136, 7
    %v138 = vsub.s32 0, %v137
    %v139 = vrot.slane %v134, %v138
    %v140 = vlaneseq
    %v141 = vshrl.u32 %v140, 7
    %v142 = vsub.s32 1, %v141
    %v143 = vrot.slane %v134, %v142
    %v144 = vlaneseq
    %v145 = vshrl.u32 %v144, 7
    %v146 = vsub.s32 2, %v145
    %v147 = vrot.slane %v134, %v146
    %v148 = vlaneseq
    %v149 = vshrl.u32 %v148, 7
    %v150 = vsub.s32 3, %v149
    %v151 = vrot.slane %v134, %v150
    %156 = vmatprep.subr.mxu0 %v131
    %157 = vmatpush1.msra.mxu0 %v130
    %158 = vmatprep.subr.mxu0 %v127
    %159 = vmatpush1.msra.mxu0 %v126
    %160 = vmatprep.subr.mxu0 %v123
    %161 = vmatpush1.msra.mxu0 %v122
    %162 = vmatprep.subr.mxu0 %v119
    %163 = vmatpush1.msra.mxu0 %v118
    %164 = vmatprep.subr.mxu0 %v115
    %165 = vmatpush1.msra.mxu0 %v114
    %166 = vmatprep.subr.mxu0 %v111
    %167 = vmatpush1.msra.mxu0 %v110
    %168 = vmatprep.subr.mxu0 %v107
    %169 = vmatpush1.msra.mxu0 %v106
    %170 = vmatprep.subr.mxu0 %v103
    %171 = vmatpush1.msra.mxu0 %v102
    %172 = vmatprep.subr.mxu0 %v99
    %173 = vmatpush1.msra.mxu0 %v98
    %174 = vmatprep.subr.mxu0 %v95
    %175 = vmatpush1.msra.mxu0 %v94
    %176 = vmatprep.subr.mxu0 %v91
    %177 = vmatpush1.msra.mxu0 %v90
    %178 = vmatprep.subr.mxu0 %v87
    %179 = vmatpush1.msra.mxu0 %v86
    %180 = vmatprep.subr.mxu0 %v83
    %181 = vmatpush1.msra.mxu0 %v82
    %182 = vmatprep.subr.mxu0 %v79
    %183 = vmatpush1.msra.mxu0 %v78
    %184 = vmatprep.subr.mxu0 %v75
    %185 = vmatpush1.msra.mxu0 %v74
    %186 = vmatprep.subr.mxu0 %v71
    %187 = vmatpush1.msra.mxu0 %v70
    %188 = vmatprep.subr.mxu0 0.0
    %189 = vmatpush2.msra.mxu0 0.0
    %190 = vmatprep.subr.mxu0 0.0
    %191 = vmatpush2.msra.mxu0 0.0
    %192 = vmatprep.subr.mxu0 0.0
    %193 = vmatpush2.msra.mxu0 0.0
    %194 = vmatprep.subr.mxu0 0.0
    %195 = vmatpush2.msra.mxu0 0.0
    %196 = vmatprep.subr.mxu0 0.0
    %197 = vmatpush2.msra.mxu0 0.0
    %198 = vmatprep.subr.mxu0 0.0
    %199 = vmatpush2.msra.mxu0 0.0
    %200 = vmatprep.subr.mxu0 0.0
    %201 = vmatpush2.msra.mxu0 0.0
    %202 = vmatprep.subr.mxu0 0.0
    %203 = vmatpush2.msra.mxu0 0.0
    %204 = vmatprep.subr.mxu0 0.0
    %205 = vmatpush2.msra.mxu0 0.0
    %206 = vmatprep.subr.mxu0 0.0
    %207 = vmatpush2.msra.mxu0 0.0
    %208 = vmatprep.subr.mxu0 0.0
    %209 = vmatpush2.msra.mxu0 0.0
    %210 = vmatprep.subr.mxu0 0.0
    %211 = vmatpush2.msra.mxu0 0.0
    %212 = vmatprep.subr.mxu0 0.0
    %213 = vmatpush2.msra.mxu0 0.0
    %214 = vmatprep.subr.mxu0 0.0
    %215 = vmatpush2.msra.mxu0 0.0
    %216 = vmatprep.subr.mxu0 0.0
    %217 = vmatpush2.msra.mxu0 0.0
    %218 = vmatprep.subr.mxu0 0.0
    %219 = vmatpush2.msra.mxu0 0.0
    %220 = vmatprep.mubr.f32.mxu0 0.0
    %221 = vmatmul.mubr.f32.gmra.mxu0 %v62
    %v222 = vpop.f32.mrf.mxu0
    %v223 = vadd.f32 %v139, %v222
    %v224 = vpop.f32.mrf.mxu0
    %v225 = vadd.f32 %v143, %v224
    %226 = vmatprep.mubr.f32.mxu0 0.0
    %227 = vmatmul.mubr.f32.gmra.mxu0 %v63
    %v228 = vpop.f32.mrf.mxu0
    %v229 = vadd.f32 %v139, %v228
    %v230 = vpop.f32.mrf.mxu0
    %v231 = vadd.f32 %v143, %v230
    %232 = vmatprep.mubr.f32.mxu0 0.0
    %233 = vmatmul.mubr.f32.gmra.mxu0 %v64
    %v234 = vpop.f32.mrf.mxu0
    %v235 = vadd.f32 %v139, %v234
    %v236 = vpop.f32.mrf.mxu0
    %v237 = vadd.f32 %v143, %v236
    %238 = vmatprep.mubr.f32.mxu0 0.0
    %239 = vmatmul.mubr.f32.gmra.mxu0 %v65
    %v240 = vpop.f32.mrf.mxu0
    %v241 = vadd.f32 %v139, %v240
    %v242 = vpop.f32.mrf.mxu0
    %v243 = vadd.f32 %v143, %v242
    %244 = vmatprep.mubr.f32.mxu0 0.0
    %245 = vmatmul.mubr.f32.gmra.mxu0 %v66
    %v246 = vpop.f32.mrf.mxu0
    %v247 = vadd.f32 %v139, %v246
    %v248 = vpop.f32.mrf.mxu0
    %v249 = vadd.f32 %v143, %v248
    %250 = vmatprep.mubr.f32.mxu0 0.0
    %251 = vmatmul.mubr.f32.gmra.mxu0 %v67
    %v252 = vpop.f32.mrf.mxu0
    %v253 = vadd.f32 %v139, %v252
    %v254 = vpop.f32.mrf.mxu0
    %v255 = vadd.f32 %v143, %v254
    %256 = vmatprep.mubr.f32.mxu0 0.0
    %257 = vmatmul.mubr.f32.gmra.mxu0 %v68
    %v258 = vpop.f32.mrf.mxu0
    %v259 = vadd.f32 %v139, %v258
    %v260 = vpop.f32.mrf.mxu0
    %v261 = vadd.f32 %v143, %v260
    %262 = vmatprep.mubr.f32.mxu0 0.0
    %263 = vmatmul.mubr.f32.gmra.mxu0 %v69
    %v264 = vpop.f32.mrf.mxu0
    %v265 = vadd.f32 %v139, %v264
    %v266 = vpop.f32.mrf.mxu0
    %v267 = vadd.f32 %v143, %v266
    %268 = vdwg.mxu0
    %269 = vmatprep.subr.mxu0 %v133
    %270 = vmatpush1.msra.mxu0 %v132
    %271 = vmatprep.subr.mxu0 %v129
    %272 = vmatpush1.msra.mxu0 %v128
    %273 = vmatprep.subr.mxu0 %v125
    %274 = vmatpush1.msra.mxu0 %v124
    %275 = vmatprep.subr.mxu0 %v121
    %276 = vmatpush1.msra.mxu0 %v120
    %277 = vmatprep.subr.mxu0 %v117
    %278 = vmatpush1.msra.mxu0 %v116
    %279 = vmatprep.subr.mxu0 %v113
    %280 = vmatpush1.msra.mxu0 %v112
    %281 = vmatprep.subr.mxu0 %v109
    %282 = vmatpush1.msra.mxu0 %v108
    %283 = vmatprep.subr.mxu0 %v105
    %284 = vmatpush1.msra.mxu0 %v104
    %285 = vmatprep.subr.mxu0 %v101
    %286 = vmatpush1.msra.mxu0 %v100
    %287 = vmatprep.subr.mxu0 %v97
    %288 = vmatpush1.msra.mxu0 %v96
    %289 = vmatprep.subr.mxu0 %v93
    %290 = vmatpush1.msra.mxu0 %v92
    %291 = vmatprep.subr.mxu0 %v89
    %292 = vmatpush1.msra.mxu0 %v88
    %293 = vmatprep.subr.mxu0 %v85
    %294 = vmatpush1.msra.mxu0 %v84
    %295 = vmatprep.subr.mxu0 %v81
    %296 = vmatpush1.msra.mxu0 %v80
    %297 = vmatprep.subr.mxu0 %v77
    %298 = vmatpush1.msra.mxu0 %v76
    %299 = vmatprep.subr.mxu0 %v73
    %300 = vmatpush1.msra.mxu0 %v72
    %301 = vmatprep.subr.mxu0 0.0
    %302 = vmatpush2.msra.mxu0 0.0
    %303 = vmatprep.subr.mxu0 0.0
    %304 = vmatpush2.msra.mxu0 0.0
    %305 = vmatprep.subr.mxu0 0.0
    %306 = vmatpush2.msra.mxu0 0.0
    %307 = vmatprep.subr.mxu0 0.0
    %308 = vmatpush2.msra.mxu0 0.0
    %309 = vmatprep.subr.mxu0 0.0
    %310 = vmatpush2.msra.mxu0 0.0
    %311 = vmatprep.subr.mxu0 0.0
    %312 = vmatpush2.msra.mxu0 0.0
    %313 = vmatprep.subr.mxu0 0.0
    %314 = vmatpush2.msra.mxu0 0.0
    %315 = vmatprep.subr.mxu0 0.0
    %316 = vmatpush2.msra.mxu0 0.0
    %317 = vmatprep.subr.mxu0 0.0
    %318 = vmatpush2.msra.mxu0 0.0
    %319 = vmatprep.subr.mxu0 0.0
    %320 = vmatpush2.msra.mxu0 0.0
    %321 = vmatprep.subr.mxu0 0.0
    %322 = vmatpush2.msra.mxu0 0.0
    %323 = vmatprep.subr.mxu0 0.0
    %324 = vmatpush2.msra.mxu0 0.0
    %325 = vmatprep.subr.mxu0 0.0
    %326 = vmatpush2.msra.mxu0 0.0
    %327 = vmatprep.subr.mxu0 0.0
    %328 = vmatpush2.msra.mxu0 0.0
    %329 = vmatprep.subr.mxu0 0.0
    %330 = vmatpush2.msra.mxu0 0.0
    %331 = vmatprep.subr.mxu0 0.0
    %332 = vmatpush2.msra.mxu0 0.0
    %333 = vmatprep.mubr.f32.mxu0 0.0
    %334 = vmatmul.mubr.f32.gmra.mxu0 %v62
    %v335 = vpop.f32.mrf.mxu0
    %v336 = vadd.f32 %v147, %v335
    %v337 = vpop.f32.mrf.mxu0
    %v338 = vadd.f32 %v151, %v337
    %339 = vmatprep.mubr.f32.mxu0 0.0
    %340 = vmatmul.mubr.f32.gmra.mxu0 %v63
    %v341 = vpop.f32.mrf.mxu0
    %v342 = vadd.f32 %v147, %v341
    %v343 = vpop.f32.mrf.mxu0
    %v344 = vadd.f32 %v151, %v343
    %345 = vmatprep.mubr.f32.mxu0 0.0
    %346 = vmatmul.mubr.f32.gmra.mxu0 %v64
    %v347 = vpop.f32.mrf.mxu0
    %v348 = vadd.f32 %v147, %v347
    %v349 = vpop.f32.mrf.mxu0
    %v350 = vadd.f32 %v151, %v349
    %351 = vmatprep.mubr.f32.mxu0 0.0
    %352 = vmatmul.mubr.f32.gmra.mxu0 %v65
    %v353 = vpop.f32.mrf.mxu0
    %v354 = vadd.f32 %v147, %v353
    %v355 = vpop.f32.mrf.mxu0
    %v356 = vadd.f32 %v151, %v355
    %357 = vmatprep.mubr.f32.mxu0 0.0
    %358 = vmatmul.mubr.f32.gmra.mxu0 %v66
    %v359 = vpop.f32.mrf.mxu0
    %v360 = vadd.f32 %v147, %v359
    %v361 = vpop.f32.mrf.mxu0
    %v362 = vadd.f32 %v151, %v361
    %363 = vmatprep.mubr.f32.mxu0 0.0
    %364 = vmatmul.mubr.f32.gmra.mxu0 %v67
    %v365 = vpop.f32.mrf.mxu0
    %v366 = vadd.f32 %v147, %v365
    %v367 = vpop.f32.mrf.mxu0
    %v368 = vadd.f32 %v151, %v367
    %369 = vmatprep.mubr.f32.mxu0 0.0
    %370 = vmatmul.mubr.f32.gmra.mxu0 %v68
    %v371 = vpop.f32.mrf.mxu0
    %v372 = vadd.f32 %v147, %v371
    %v373 = vpop.f32.mrf.mxu0
    %v374 = vadd.f32 %v151, %v373
    %375 = vmatprep.mubr.f32.mxu0 0.0
    %376 = vmatmul.mubr.f32.gmra.mxu0 %v69
    %v377 = vpop.f32.mrf.mxu0
    %v378 = vadd.f32 %v147, %v377
    %v379 = vpop.f32.mrf.mxu0
    %v380 = vadd.f32 %v151, %v379
    %381 = vdwg.mxu0
    %382 = vst [vmem:[#allocation2] sm:$0xff] %v223
    %383 = vst [vmem:[#allocation2 + $0x8] sm:$0xff] %v225
    %384 = vst [vmem:[#allocation2 + $0x10] sm:$0xff] %v336
    %385 = vst [vmem:[#allocation2 + $0x18] sm:$0xff] %v338
    %386 = vst [vmem:[#allocation2 + $0x20] sm:$0xff] %v229
    %387 = vst [vmem:[#allocation2 + $0x28] sm:$0xff] %v231
    %388 = vst [vmem:[#allocation2 + $0x30] sm:$0xff] %v342
    %389 = vst [vmem:[#allocation2 + $0x38] sm:$0xff] %v344
    %390 = vst [vmem:[#allocation2 + $0x40] sm:$0xff] %v235
    %391 = vst [vmem:[#allocation2 + $0x48] sm:$0xff] %v237
    %392 = vst [vmem:[#allocation2 + $0x50] sm:$0xff] %v348
    %393 = vst [vmem:[#allocation2 + $0x58] sm:$0xff] %v350
    %394 = vst [vmem:[#allocation2 + $0x60] sm:$0xff] %v241
    %395 = vst [vmem:[#allocation2 + $0x68] sm:$0xff] %v243
    %396 = vst [vmem:[#allocation2 + $0x70] sm:$0xff] %v354
    %397 = vst [vmem:[#allocation2 + $0x78] sm:$0xff] %v356
    %398 = vst [vmem:[#allocation2 + $0x80] sm:$0xff] %v247
    %399 = vst [vmem:[#allocation2 + $0x88] sm:$0xff] %v249
    %400 = vst [vmem:[#allocation2 + $0x90] sm:$0xff] %v360
    %401 = vst [vmem:[#allocation2 + $0x98] sm:$0xff] %v362
    %402 = vst [vmem:[#allocation2 + $0xa0] sm:$0xff] %v253
    %403 = vst [vmem:[#allocation2 + $0xa8] sm:$0xff] %v255
    %404 = vst [vmem:[#allocation2 + $0xb0] sm:$0xff] %v366
    %405 = vst [vmem:[#allocation2 + $0xb8] sm:$0xff] %v368
    %406 = vst [vmem:[#allocation2 + $0xc0] sm:$0xff] %v259
    %407 = vst [vmem:[#allocation2 + $0xc8] sm:$0xff] %v261
    %408 = vst [vmem:[#allocation2 + $0xd0] sm:$0xff] %v372
    %409 = vst [vmem:[#allocation2 + $0xd8] sm:$0xff] %v374
    %410 = vst [vmem:[#allocation2 + $0xe0] sm:$0xff] %v265
    %411 = vst [vmem:[#allocation2 + $0xe8] sm:$0xff] %v267
    %412 = vst [vmem:[#allocation2 + $0xf0] sm:$0xff] %v378
    %413 = vst [vmem:[#allocation2 + $0xf8] sm:$0xff] %v380
    %v414 = vld [vmem:[#allocation2] sm:$0xff]
    %v415 = vld [vmem:[#allocation2 + $0x8] sm:$0xff]
    %v416 = vld [vmem:[#allocation2 + $0x10] sm:$0xff]
    %v417 = vld [vmem:[#allocation2 + $0x18] sm:$0xff]
    %v418 = vld [vmem:[#allocation8] sm:$0xff]
    %v419 = vld [vmem:[#allocation8 + $0x8] sm:$0xff]
    %v420 = vld [vmem:[#allocation8 + $0x10] sm:$0xff]
    %v421 = vld [vmem:[#allocation8 + $0x18] sm:$0xff]
    %v422 = vld [vmem:[#allocation8 + $0x20] sm:$0xff]
    %v423 = vld [vmem:[#allocation8 + $0x28] sm:$0xff]
    %v424 = vld [vmem:[#allocation8 + $0x30] sm:$0xff]
    %v425 = vld [vmem:[#allocation8 + $0x38] sm:$0xff]
    %v426 = vld [vmem:[#allocation8 + $0x40] sm:$0xff]
    %v427 = vld [vmem:[#allocation8 + $0x48] sm:$0xff]
    %v428 = vld [vmem:[#allocation8 + $0x50] sm:$0xff]
    %v429 = vld [vmem:[#allocation8 + $0x58] sm:$0xff]
    %v430 = vld [vmem:[#allocation8 + $0x60] sm:$0xff]
    %v431 = vld [vmem:[#allocation8 + $0x68] sm:$0xff]
    %v432 = vld [vmem:[#allocation8 + $0x70] sm:$0xff]
    %v433 = vld [vmem:[#allocation8 + $0x78] sm:$0xff]
    %v434 = vld [vmem:[#allocation8 + $0x80] sm:$0xff]
    %v435 = vld [vmem:[#allocation8 + $0x88] sm:$0xff]
    %v436 = vld [vmem:[#allocation8 + $0x90] sm:$0xff]
    %v437 = vld [vmem:[#allocation8 + $0x98] sm:$0xff]
    %v438 = vld [vmem:[#allocation8 + $0xa0] sm:$0xff]
    %v439 = vld [vmem:[#allocation8 + $0xa8] sm:$0xff]
    %v440 = vld [vmem:[#allocation8 + $0xb0] sm:$0xff]
    %v441 = vld [vmem:[#allocation8 + $0xb8] sm:$0xff]
    %v442 = vld [vmem:[#allocation8 + $0xc0] sm:$0xff]
    %v443 = vld [vmem:[#allocation8 + $0xc8] sm:$0xff]
    %v444 = vld [vmem:[#allocation8 + $0xd0] sm:$0xff]
    %v445 = vld [vmem:[#allocation8 + $0xd8] sm:$0xff]
    %v446 = vld [vmem:[#allocation8 + $0xe0] sm:$0xff]
    %v447 = vld [vmem:[#allocation8 + $0xe8] sm:$0xff]
    %v448 = vld [vmem:[#allocation8 + $0xf0] sm:$0xff]
    %v449 = vld [vmem:[#allocation8 + $0xf8] sm:$0xff]
    %v450 = vld [vmem:[#allocation8 + $0x100] sm:$0xff]
    %v451 = vld [vmem:[#allocation8 + $0x108] sm:$0xff]
    %v452 = vld [vmem:[#allocation8 + $0x110] sm:$0xff]
    %v453 = vld [vmem:[#allocation8 + $0x118] sm:$0xff]
    %v454 = vld [vmem:[#allocation8 + $0x120] sm:$0xff]
    %v455 = vld [vmem:[#allocation8 + $0x128] sm:$0xff]
    %v456 = vld [vmem:[#allocation8 + $0x130] sm:$0xff]
    %v457 = vld [vmem:[#allocation8 + $0x138] sm:$0xff]
    %v458 = vld [vmem:[#allocation8 + $0x140] sm:$0xff]
    %v459 = vld [vmem:[#allocation8 + $0x148] sm:$0xff]
    %v460 = vld [vmem:[#allocation8 + $0x150] sm:$0xff]
    %v461 = vld [vmem:[#allocation8 + $0x158] sm:$0xff]
    %v462 = vld [vmem:[#allocation8 + $0x160] sm:$0xff]
    %v463 = vld [vmem:[#allocation8 + $0x168] sm:$0xff]
    %v464 = vld [vmem:[#allocation8 + $0x170] sm:$0xff]
    %v465 = vld [vmem:[#allocation8 + $0x178] sm:$0xff]
    %v466 = vld [vmem:[#allocation8 + $0x180] sm:$0xff]
    %v467 = vld [vmem:[#allocation8 + $0x188] sm:$0xff]
    %v468 = vld [vmem:[#allocation8 + $0x190] sm:$0xff]
    %v469 = vld [vmem:[#allocation8 + $0x198] sm:$0xff]
    %v470 = vld [vmem:[#allocation8 + $0x1a0] sm:$0xff]
    %v471 = vld [vmem:[#allocation8 + $0x1a8] sm:$0xff]
    %v472 = vld [vmem:[#allocation8 + $0x1b0] sm:$0xff]
    %v473 = vld [vmem:[#allocation8 + $0x1b8] sm:$0xff]
    %v474 = vld [vmem:[#allocation8 + $0x1c0] sm:$0xff]
    %v475 = vld [vmem:[#allocation8 + $0x1c8] sm:$0xff]
    %v476 = vld [vmem:[#allocation8 + $0x1d0] sm:$0xff]
    %v477 = vld [vmem:[#allocation8 + $0x1d8] sm:$0xff]
    %v478 = vld [vmem:[#allocation8 + $0x1e0] sm:$0xff]
    %v479 = vld [vmem:[#allocation8 + $0x1e8] sm:$0xff]
    %v480 = vld [vmem:[#allocation8 + $0x1f0] sm:$0xff]
    %v481 = vld [vmem:[#allocation8 + $0x1f8] sm:$0xff]
    %482 = vmatprep.subr.mxu0 %v479
    %483 = vmatpush1.msra.mxu0 %v478
    %484 = vmatprep.subr.mxu0 %v475
    %485 = vmatpush1.msra.mxu0 %v474
    %486 = vmatprep.subr.mxu0 %v471
    %487 = vmatpush1.msra.mxu0 %v470
    %488 = vmatprep.subr.mxu0 %v467
    %489 = vmatpush1.msra.mxu0 %v466
    %490 = vmatprep.subr.mxu0 %v463
    %491 = vmatpush1.msra.mxu0 %v462
    %492 = vmatprep.subr.mxu0 %v459
    %493 = vmatpush1.msra.mxu0 %v458
    %494 = vmatprep.subr.mxu0 %v455
    %495 = vmatpush1.msra.mxu0 %v454
    %496 = vmatprep.subr.mxu0 %v451
    %497 = vmatpush1.msra.mxu0 %v450
    %498 = vmatprep.subr.mxu0 %v447
    %499 = vmatpush1.msra.mxu0 %v446
    %500 = vmatprep.subr.mxu0 %v443
    %501 = vmatpush1.msra.mxu0 %v442
    %502 = vmatprep.subr.mxu0 %v439
    %503 = vmatpush1.msra.mxu0 %v438
    %504 = vmatprep.subr.mxu0 %v435
    %505 = vmatpush1.msra.mxu0 %v434
    %506 = vmatprep.subr.mxu0 %v431
    %507 = vmatpush1.msra.mxu0 %v430
    %508 = vmatprep.subr.mxu0 %v427
    %509 = vmatpush1.msra.mxu0 %v426
    %510 = vmatprep.subr.mxu0 %v423
    %511 = vmatpush1.msra.mxu0 %v422
    %512 = vmatprep.subr.mxu0 %v419
    %513 = vmatpush1.msra.mxu0 %v418
    %514 = vmatprep.subr.mxu0 0.0
    %515 = vmatpush2.msra.mxu0 0.0
    %516 = vmatprep.subr.mxu0 0.0
    %517 = vmatpush2.msra.mxu0 0.0
    %518 = vmatprep.subr.mxu0 0.0
    %519 = vmatpush2.msra.mxu0 0.0
    %520 = vmatprep.subr.mxu0 0.0
    %521 = vmatpush2.msra.mxu0 0.0
    %522 = vmatprep.subr.mxu0 0.0
    %523 = vmatpush2.msra.mxu0 0.0
    %524 = vmatprep.subr.mxu0 0.0
    %525 = vmatpush2.msra.mxu0 0.0
    %526 = vmatprep.subr.mxu0 0.0
    %527 = vmatpush2.msra.mxu0 0.0
    %528 = vmatprep.subr.mxu0 0.0
    %529 = vmatpush2.msra.mxu0 0.0
    %530 = vmatprep.subr.mxu0 0.0
    %531 = vmatpush2.msra.mxu0 0.0
    %532 = vmatprep.subr.mxu0 0.0
    %533 = vmatpush2.msra.mxu0 0.0
    %534 = vmatprep.subr.mxu0 0.0
    %535 = vmatpush2.msra.mxu0 0.0
    %536 = vmatprep.subr.mxu0 0.0
    %537 = vmatpush2.msra.mxu0 0.0
    %538 = vmatprep.subr.mxu0 0.0
    %539 = vmatpush2.msra.mxu0 0.0
    %540 = vmatprep.subr.mxu0 0.0
    %541 = vmatpush2.msra.mxu0 0.0
    %542 = vmatprep.subr.mxu0 0.0
    %543 = vmatpush2.msra.mxu0 0.0
    %544 = vmatprep.subr.mxu0 0.0
    %545 = vmatpush2.msra.mxu0 0.0
    %546 = vmatprep.mubr.f32.mxu0 0.0
    %547 = vmatmul.mubr.f32.gmra.mxu0 0.0
    %v548 = vpop.f32.mrf.mxu0
    %v549 = vadd.f32 0.0, %v548
    %v550 = vpop.f32.mrf.mxu0
    %v551 = vadd.f32 0.0, %v550
    %552 = vdwg.mxu0
    %553 = vmatprep.subr.mxu0 %v481
    %554 = vmatpush1.msra.mxu0 %v480
    %555 = vmatprep.subr.mxu0 %v477
    %556 = vmatpush1.msra.mxu0 %v476
    %557 = vmatprep.subr.mxu0 %v473
    %558 = vmatpush1.msra.mxu0 %v472
    %559 = vmatprep.subr.mxu0 %v469
    %560 = vmatpush1.msra.mxu0 %v468
    %561 = vmatprep.subr.mxu0 %v465
    %562 = vmatpush1.msra.mxu0 %v464
    %563 = vmatprep.subr.mxu0 %v461
    %564 = vmatpush1.msra.mxu0 %v460
    %565 = vmatprep.subr.mxu0 %v457
    %566 = vmatpush1.msra.mxu0 %v456
    %567 = vmatprep.subr.mxu0 %v453
    %568 = vmatpush1.msra.mxu0 %v452
    %569 = vmatprep.subr.mxu0 %v449
    %570 = vmatpush1.msra.mxu0 %v448
    %571 = vmatprep.subr.mxu0 %v445
    %572 = vmatpush1.msra.mxu0 %v444
    %573 = vmatprep.subr.mxu0 %v441
    %574 = vmatpush1.msra.mxu0 %v440
    %575 = vmatprep.subr.mxu0 %v437
    %576 = vmatpush1.msra.mxu0 %v436
    %577 = vmatprep.subr.mxu0 %v433
    %578 = vmatpush1.msra.mxu0 %v432
    %579 = vmatprep.subr.mxu0 %v429
    %580 = vmatpush1.msra.mxu0 %v428
    %581 = vmatprep.subr.mxu0 %v425
    %582 = vmatpush1.msra.mxu0 %v424
    %583 = vmatprep.subr.mxu0 %v421
    %584 = vmatpush1.msra.mxu0 %v420
    %585 = vmatprep.subr.mxu0 0.0
    %586 = vmatpush2.msra.mxu0 0.0
    %587 = vmatprep.subr.mxu0 0.0
    %588 = vmatpush2.msra.mxu0 0.0
    %589 = vmatprep.subr.mxu0 0.0
    %590 = vmatpush2.msra.mxu0 0.0
    %591 = vmatprep.subr.mxu0 0.0
    %592 = vmatpush2.msra.mxu0 0.0
    %593 = vmatprep.subr.mxu0 0.0
    %594 = vmatpush2.msra.mxu0 0.0
    %595 = vmatprep.subr.mxu0 0.0
    %596 = vmatpush2.msra.mxu0 0.0
    %597 = vmatprep.subr.mxu0 0.0
    %598 = vmatpush2.msra.mxu0 0.0
    %599 = vmatprep.subr.mxu0 0.0
    %600 = vmatpush2.msra.mxu0 0.0
    %601 = vmatprep.subr.mxu0 0.0
    %602 = vmatpush2.msra.mxu0 0.0
    %603 = vmatprep.subr.mxu0 0.0
    %604 = vmatpush2.msra.mxu0 0.0
    %605 = vmatprep.subr.mxu0 0.0
    %606 = vmatpush2.msra.mxu0 0.0
    %607 = vmatprep.subr.mxu0 0.0
    %608 = vmatpush2.msra.mxu0 0.0
    %609 = vmatprep.subr.mxu0 0.0
    %610 = vmatpush2.msra.mxu0 0.0
    %611 = vmatprep.subr.mxu0 0.0
    %612 = vmatpush2.msra.mxu0 0.0
    %613 = vmatprep.subr.mxu0 0.0
    %614 = vmatpush2.msra.mxu0 0.0
    %615 = vmatprep.subr.mxu0 0.0
    %616 = vmatpush2.msra.mxu0 0.0
    %617 = vmatprep.mubr.f32.mxu0 0.0
    %618 = vmatmul.mubr.f32.gmra.mxu0 0.0
    %v619 = vpop.f32.mrf.mxu0
    %v620 = vadd.f32 0.0, %v619
    %v621 = vpop.f32.mrf.mxu0
    %v622 = vadd.f32 0.0, %v621
    %623 = vdwg.mxu0
    %v624 = vadd.f32 %v414, %v549
    %v625 = vadd.f32 %v415, %v551
    %v626 = vadd.f32 %v416, %v620
    %v627 = vadd.f32 %v417, %v622
    %v628 = vmul.f32 %v624, 0.5
    %v629 = vtanh.pop %v628
    %v630 = vmul.f32 %v629, 0.5
    %v631 = vadd.f32 %v630, 0.5
    %v632 = vmul.f32 %v625, 0.5
    %v633 = vtanh.pop %v632
    %v634 = vmul.f32 %v633, 0.5
    %v635 = vadd.f32 %v634, 0.5
    %v636 = vtanh.pop %v626
    %v637 = vmul.f32 %v627, 0.5
    %v638 = vtanh.pop %v637
    %v639 = vmul.f32 %v638, 0.5
    %v640 = vadd.f32 %v639, 0.5
    %v641 = vmul.f32 %v635, 0.0
    %v642 = vmul.f32 %v631, %v636
    %v643 = vadd.f32 %v641, %v642
    %v644 = vtanh.pop %v643
    %v645 = vmul.f32 %v640, %v644
    %s646 = scalar_lea.vmem [#allocation2], 32
    %v647 = vld [vmem:[%s646] sm:$0xff]
    %v648 = vld [vmem:[%s646 + $0x8] sm:$0xff]
    %v649 = vld [vmem:[%s646 + $0x10] sm:$0xff]
    %v650 = vld [vmem:[%s646 + $0x18] sm:$0xff]
    %651 = vmatprep.subr.mxu0 %v479
    %652 = vmatpush1.msra.mxu0 %v478
    %653 = vmatprep.subr.mxu0 %v475
    %654 = vmatpush1.msra.mxu0 %v474
    %655 = vmatprep.subr.mxu0 %v471
    %656 = vmatpush1.msra.mxu0 %v470
    %657 = vmatprep.subr.mxu0 %v467
    %658 = vmatpush1.msra.mxu0 %v466
    %659 = vmatprep.subr.mxu0 %v463
    %660 = vmatpush1.msra.mxu0 %v462
    %661 = vmatprep.subr.mxu0 %v459
    %662 = vmatpush1.msra.mxu0 %v458
    %663 = vmatprep.subr.mxu0 %v455
    %664 = vmatpush1.msra.mxu0 %v454
    %665 = vmatprep.subr.mxu0 %v451
    %666 = vmatpush1.msra.mxu0 %v450
    %667 = vmatprep.subr.mxu0 %v447
    %668 = vmatpush1.msra.mxu0 %v446
    %669 = vmatprep.subr.mxu0 %v443
    %670 = vmatpush1.msra.mxu0 %v442
    %671 = vmatprep.subr.mxu0 %v439
    %672 = vmatpush1.msra.mxu0 %v438
    %673 = vmatprep.subr.mxu0 %v435
    %674 = vmatpush1.msra.mxu0 %v434
    %675 = vmatprep.subr.mxu0 %v431
    %676 = vmatpush1.msra.mxu0 %v430
    %677 = vmatprep.subr.mxu0 %v427
    %678 = vmatpush1.msra.mxu0 %v426
    %679 = vmatprep.subr.mxu0 %v423
    %680 = vmatpush1.msra.mxu0 %v422
    %681 = vmatprep.subr.mxu0 %v419
    %682 = vmatpush1.msra.mxu0 %v418
    %683 = vmatprep.subr.mxu0 0.0
    %684 = vmatpush2.msra.mxu0 0.0
    %685 = vmatprep.subr.mxu0 0.0
    %686 = vmatpush2.msra.mxu0 0.0
    %687 = vmatprep.subr.mxu0 0.0
    %688 = vmatpush2.msra.mxu0 0.0
    %689 = vmatprep.subr.mxu0 0.0
    %690 = vmatpush2.msra.mxu0 0.0
    %691 = vmatprep.subr.mxu0 0.0
    %692 = vmatpush2.msra.mxu0 0.0
    %693 = vmatprep.subr.mxu0 0.0
    %694 = vmatpush2.msra.mxu0 0.0
    %695 = vmatprep.subr.mxu0 0.0
    %696 = vmatpush2.msra.mxu0 0.0
    %697 = vmatprep.subr.mxu0 0.0
    %698 = vmatpush2.msra.mxu0 0.0
    %699 = vmatprep.subr.mxu0 0.0
    %700 = vmatpush2.msra.mxu0 0.0
    %701 = vmatprep.subr.mxu0 0.0
    %702 = vmatpush2.msra.mxu0 0.0
    %703 = vmatprep.subr.mxu0 0.0
    %704 = vmatpush2.msra.mxu0 0.0
    %705 = vmatprep.subr.mxu0 0.0
    %706 = vmatpush2.msra.mxu0 0.0
    %707 = vmatprep.subr.mxu0 0.0
    %708 = vmatpush2.msra.mxu0 0.0
    %709 = vmatprep.subr.mxu0 0.0
    %710 = vmatpush2.msra.mxu0 0.0
    %711 = vmatprep.subr.mxu0 0.0
    %712 = vmatpush2.msra.mxu0 0.0
    %713 = vmatprep.subr.mxu0 0.0
    %714 = vmatpush2.msra.mxu0 0.0
    %715 = vmatprep.mubr.f32.mxu0 0.0
    %716 = vmatmul.mubr.f32.gmra.mxu0 %v645
    %v717 = vpop.f32.mrf.mxu0
    %v718 = vadd.f32 0.0, %v717
    %v719 = vpop.f32.mrf.mxu0
    %v720 = vadd.f32 0.0, %v719
    %721 = vdwg.mxu0
    %722 = vmatprep.subr.mxu0 %v481
    %723 = vmatpush1.msra.mxu0 %v480
    %724 = vmatprep.subr.mxu0 %v477
    %725 = vmatpush1.msra.mxu0 %v476
    %726 = vmatprep.subr.mxu0 %v473
    %727 = vmatpush1.msra.mxu0 %v472
    %728 = vmatprep.subr.mxu0 %v469
    %729 = vmatpush1.msra.mxu0 %v468
    %730 = vmatprep.subr.mxu0 %v465
    %731 = vmatpush1.msra.mxu0 %v464
    %732 = vmatprep.subr.mxu0 %v461
    %733 = vmatpush1.msra.mxu0 %v460
    %734 = vmatprep.subr.mxu0 %v457
    %735 = vmatpush1.msra.mxu0 %v456
    %736 = vmatprep.subr.mxu0 %v453
    %737 = vmatpush1.msra.mxu0 %v452
    %738 = vmatprep.subr.mxu0 %v449
    %739 = vmatpush1.msra.mxu0 %v448
    %740 = vmatprep.subr.mxu0 %v445
    %741 = vmatpush1.msra.mxu0 %v444
    %742 = vmatprep.subr.mxu0 %v441
    %743 = vmatpush1.msra.mxu0 %v440
    %744 = vmatprep.subr.mxu0 %v437
    %745 = vmatpush1.msra.mxu0 %v436
    %746 = vmatprep.subr.mxu0 %v433
    %747 = vmatpush1.msra.mxu0 %v432
    %748 = vmatprep.subr.mxu0 %v429
    %749 = vmatpush1.msra.mxu0 %v428
    %750 = vmatprep.subr.mxu0 %v425
    %751 = vmatpush1.msra.mxu0 %v424
    %752 = vmatprep.subr.mxu0 %v421
    %753 = vmatpush1.msra.mxu0 %v420
    %754 = vmatprep.subr.mxu0 0.0
    %755 = vmatpush2.msra.mxu0 0.0
    %756 = vmatprep.subr.mxu0 0.0
    %757 = vmatpush2.msra.mxu0 0.0
    %758 = vmatprep.subr.mxu0 0.0
    %759 = vmatpush2.msra.mxu0 0.0
    %760 = vmatprep.subr.mxu0 0.0
    %761 = vmatpush2.msra.mxu0 0.0
    %762 = vmatprep.subr.mxu0 0.0
    %763 = vmatpush2.msra.mxu0 0.0
    %764 = vmatprep.subr.mxu0 0.0
    %765 = vmatpush2.msra.mxu0 0.0
    %766 = vmatprep.subr.mxu0 0.0
    %767 = vmatpush2.msra.mxu0 0.0
    %768 = vmatprep.subr.mxu0 0.0
    %769 = vmatpush2.msra.mxu0 0.0
    %770 = vmatprep.subr.mxu0 0.0
    %771 = vmatpush2.msra.mxu0 0.0
    %772 = vmatprep.subr.mxu0 0.0
    %773 = vmatpush2.msra.mxu0 0.0
    %774 = vmatprep.subr.mxu0 0.0
    %775 = vmatpush2.msra.mxu0 0.0
    %776 = vmatprep.subr.mxu0 0.0
    %777 = vmatpush2.msra.mxu0 0.0
    %778 = vmatprep.subr.mxu0 0.0
    %779 = vmatpush2.msra.mxu0 0.0
    %780 = vmatprep.subr.mxu0 0.0
    %781 = vmatpush2.msra.mxu0 0.0
    %782 = vmatprep.subr.mxu0 0.0
    %783 = vmatpush2.msra.mxu0 0.0
    %784 = vmatprep.subr.mxu0 0.0
    %785 = vmatpush2.msra.mxu0 0.0
    %786 = vmatprep.mubr.f32.mxu0 0.0
    %787 = vmatmul.mubr.f32.gmra.mxu0 %v645
    %v788 = vpop.f32.mrf.mxu0
    %v789 = vadd.f32 0.0, %v788
    %v790 = vpop.f32.mrf.mxu0
    %v791 = vadd.f32 0.0, %v790
    %792 = vdwg.mxu0
    %v793 = vadd.f32 %v647, %v718
    %v794 = vadd.f32 %v648, %v720
    %v795 = vadd.f32 %v649, %v789
    %v796 = vadd.f32 %v650, %v791
    %v797 = vmul.f32 %v793, 0.5
    %v798 = vtanh.pop %v797
    %v799 = vmul.f32 %v798, 0.5
    %v800 = vadd.f32 %v799, 0.5
    %v801 = vmul.f32 %v794, 0.5
    %v802 = vtanh.pop %v801
    %v803 = vmul.f32 %v802, 0.5
    %v804 = vadd.f32 %v803, 0.5
    %v805 = vtanh.pop %v795
    %v806 = vmul.f32 %v796, 0.5
    %v807 = vtanh.pop %v806
    %v808 = vmul.f32 %v807, 0.5
    %v809 = vadd.f32 %v808, 0.5
    %v810 = vmul.f32 %v804, %v643
    %v811 = vmul.f32 %v800, %v805
    %v812 = vadd.f32 %v810, %v811
    %v813 = vtanh.pop %v812
    %v814 = vmul.f32 %v809, %v813
    %s815 = scalar_lea.vmem [#allocation2], 64
    %v816 = vld [vmem:[%s815] sm:$0xff]
    %v817 = vld [vmem:[%s815 + $0x8] sm:$0xff]
    %v818 = vld [vmem:[%s815 + $0x10] sm:$0xff]
    %v819 = vld [vmem:[%s815 + $0x18] sm:$0xff]
    %820 = vmatprep.subr.mxu0 %v479
    %821 = vmatpush1.msra.mxu0 %v478
    %822 = vmatprep.subr.mxu0 %v475
    %823 = vmatpush1.msra.mxu0 %v474
    %824 = vmatprep.subr.mxu0 %v471
    %825 = vmatpush1.msra.mxu0 %v470
    %826 = vmatprep.subr.mxu0 %v467
    %827 = vmatpush1.msra.mxu0 %v466
    %828 = vmatprep.subr.mxu0 %v463
    %829 = vmatpush1.msra.mxu0 %v462
    %830 = vmatprep.subr.mxu0 %v459
    %831 = vmatpush1.msra.mxu0 %v458
    %832 = vmatprep.subr.mxu0 %v455
    %833 = vmatpush1.msra.mxu0 %v454
    %834 = vmatprep.subr.mxu0 %v451
    %835 = vmatpush1.msra.mxu0 %v450
    %836 = vmatprep.subr.mxu0 %v447
    %837 = vmatpush1.msra.mxu0 %v446
    %838 = vmatprep.subr.mxu0 %v443
    %839 = vmatpush1.msra.mxu0 %v442
    %840 = vmatprep.subr.mxu0 %v439
    %841 = vmatpush1.msra.mxu0 %v438
    %842 = vmatprep.subr.mxu0 %v435
    %843 = vmatpush1.msra.mxu0 %v434
    %844 = vmatprep.subr.mxu0 %v431
    %845 = vmatpush1.msra.mxu0 %v430
    %846 = vmatprep.subr.mxu0 %v427
    %847 = vmatpush1.msra.mxu0 %v426
    %848 = vmatprep.subr.mxu0 %v423
    %849 = vmatpush1.msra.mxu0 %v422
    %850 = vmatprep.subr.mxu0 %v419
    %851 = vmatpush1.msra.mxu0 %v418
    %852 = vmatprep.subr.mxu0 0.0
    %853 = vmatpush2.msra.mxu0 0.0
    %854 = vmatprep.subr.mxu0 0.0
    %855 = vmatpush2.msra.mxu0 0.0
    %856 = vmatprep.subr.mxu0 0.0
    %857 = vmatpush2.msra.mxu0 0.0
    %858 = vmatprep.subr.mxu0 0.0
    %859 = vmatpush2.msra.mxu0 0.0
    %860 = vmatprep.subr.mxu0 0.0
    %861 = vmatpush2.msra.mxu0 0.0
    %862 = vmatprep.subr.mxu0 0.0
    %863 = vmatpush2.msra.mxu0 0.0
    %864 = vmatprep.subr.mxu0 0.0
    %865 = vmatpush2.msra.mxu0 0.0
    %866 = vmatprep.subr.mxu0 0.0
    %867 = vmatpush2.msra.mxu0 0.0
    %868 = vmatprep.subr.mxu0 0.0
    %869 = vmatpush2.msra.mxu0 0.0
    %870 = vmatprep.subr.mxu0 0.0
    %871 = vmatpush2.msra.mxu0 0.0
    %872 = vmatprep.subr.mxu0 0.0
    %873 = vmatpush2.msra.mxu0 0.0
    %874 = vmatprep.subr.mxu0 0.0
    %875 = vmatpush2.msra.mxu0 0.0
    %876 = vmatprep.subr.mxu0 0.0
    %877 = vmatpush2.msra.mxu0 0.0
    %878 = vmatprep.subr.mxu0 0.0
    %879 = vmatpush2.msra.mxu0 0.0
    %880 = vmatprep.subr.mxu0 0.0
    %881 = vmatpush2.msra.mxu0 0.0
    %882 = vmatprep.subr.mxu0 0.0
    %883 = vmatpush2.msra.mxu0 0.0
    %884 = vmatprep.mubr.f32.mxu0 0.0
    %885 = vmatmul.mubr.f32.gmra.mxu0 %v814
    %v886 = vpop.f32.mrf.mxu0
    %v887 = vadd.f32 0.0, %v886
    %v888 = vpop.f32.mrf.mxu0
    %v889 = vadd.f32 0.0, %v888
    %890 = vdwg.mxu0
    %891 = vmatprep.subr.mxu0 %v481
    %892 = vmatpush1.msra.mxu0 %v480
    %893 = vmatprep.subr.mxu0 %v477
    %894 = vmatpush1.msra.mxu0 %v476
    %895 = vmatprep.subr.mxu0 %v473
    %896 = vmatpush1.msra.mxu0 %v472
    %897 = vmatprep.subr.mxu0 %v469
    %898 = vmatpush1.msra.mxu0 %v468
    %899 = vmatprep.subr.mxu0 %v465
    %900 = vmatpush1.msra.mxu0 %v464
    %901 = vmatprep.subr.mxu0 %v461
    %902 = vmatpush1.msra.mxu0 %v460
    %903 = vmatprep.subr.mxu0 %v457
    %904 = vmatpush1.msra.mxu0 %v456
    %905 = vmatprep.subr.mxu0 %v453
    %906 = vmatpush1.msra.mxu0 %v452
    %907 = vmatprep.subr.mxu0 %v449
    %908 = vmatpush1.msra.mxu0 %v448
    %909 = vmatprep.subr.mxu0 %v445
    %910 = vmatpush1.msra.mxu0 %v444
    %911 = vmatprep.subr.mxu0 %v441
    %912 = vmatpush1.msra.mxu0 %v440
    %913 = vmatprep.subr.mxu0 %v437
    %914 = vmatpush1.msra.mxu0 %v436
    %915 = vmatprep.subr.mxu0 %v433
    %916 = vmatpush1.msra.mxu0 %v432
    %917 = vmatprep.subr.mxu0 %v429
    %918 = vmatpush1.msra.mxu0 %v428
    %919 = vmatprep.subr.mxu0 %v425
    %920 = vmatpush1.msra.mxu0 %v424
    %921 = vmatprep.subr.mxu0 %v421
    %922 = vmatpush1.msra.mxu0 %v420
    %923 = vmatprep.subr.mxu0 0.0
    %924 = vmatpush2.msra.mxu0 0.0
    %925 = vmatprep.subr.mxu0 0.0
    %926 = vmatpush2.msra.mxu0 0.0
    %927 = vmatprep.subr.mxu0 0.0
    %928 = vmatpush2.msra.mxu0 0.0
    %929 = vmatprep.subr.mxu0 0.0
    %930 = vmatpush2.msra.mxu0 0.0
    %931 = vmatprep.subr.mxu0 0.0
    %932 = vmatpush2.msra.mxu0 0.0
    %933 = vmatprep.subr.mxu0 0.0
    %934 = vmatpush2.msra.mxu0 0.0
    %935 = vmatprep.subr.mxu0 0.0
    %936 = vmatpush2.msra.mxu0 0.0
    %937 = vmatprep.subr.mxu0 0.0
    %938 = vmatpush2.msra.mxu0 0.0
    %939 = vmatprep.subr.mxu0 0.0
    %940 = vmatpush2.msra.mxu0 0.0
    %941 = vmatprep.subr.mxu0 0.0
    %942 = vmatpush2.msra.mxu0 0.0
    %943 = vmatprep.subr.mxu0 0.0
    %944 = vmatpush2.msra.mxu0 0.0
    %945 = vmatprep.subr.mxu0 0.0
    %946 = vmatpush2.msra.mxu0 0.0
    %947 = vmatprep.subr.mxu0 0.0
    %948 = vmatpush2.msra.mxu0 0.0
    %949 = vmatprep.subr.mxu0 0.0
    %950 = vmatpush2.msra.mxu0 0.0
    %951 = vmatprep.subr.mxu0 0.0
    %952 = vmatpush2.msra.mxu0 0.0
    %953 = vmatprep.subr.mxu0 0.0
    %954 = vmatpush2.msra.mxu0 0.0
    %955 = vmatprep.mubr.f32.mxu0 0.0
    %956 = vmatmul.mubr.f32.gmra.mxu0 %v814
    %v957 = vpop.f32.mrf.mxu0
    %v958 = vadd.f32 0.0, %v957
    %v959 = vpop.f32.mrf.mxu0
    %v960 = vadd.f32 0.0, %v959
    %961 = vdwg.mxu0
    %v962 = vadd.f32 %v816, %v887
    %v963 = vadd.f32 %v817, %v889
    %v964 = vadd.f32 %v818, %v958
    %v965 = vadd.f32 %v819, %v960
    %v966 = vmul.f32 %v962, 0.5
    %v967 = vtanh.pop %v966
    %v968 = vmul.f32 %v967, 0.5
    %v969 = vadd.f32 %v968, 0.5
    %v970 = vmul.f32 %v963, 0.5
    %v971 = vtanh.pop %v970
    %v972 = vmul.f32 %v971, 0.5
    %v973 = vadd.f32 %v972, 0.5
    %v974 = vtanh.pop %v964
    %v975 = vmul.f32 %v965, 0.5
    %v976 = vtanh.pop %v975
    %v977 = vmul.f32 %v976, 0.5
    %v978 = vadd.f32 %v977, 0.5
    %v979 = vmul.f32 %v973, %v812
    %v980 = vmul.f32 %v969, %v974
    %v981 = vadd.f32 %v979, %v980
    %v982 = vtanh.pop %v981
    %v983 = vmul.f32 %v978, %v982
    %s984 = scalar_lea.vmem [#allocation2], 96
    %v985 = vld [vmem:[%s984] sm:$0xff]
    %v986 = vld [vmem:[%s984 + $0x8] sm:$0xff]
    %v987 = vld [vmem:[%s984 + $0x10] sm:$0xff]
    %v988 = vld [vmem:[%s984 + $0x18] sm:$0xff]
    %989 = vmatprep.subr.mxu0 %v479
    %990 = vmatpush1.msra.mxu0 %v478
    %991 = vmatprep.subr.mxu0 %v475
    %992 = vmatpush1.msra.mxu0 %v474
    %993 = vmatprep.subr.mxu0 %v471
    %994 = vmatpush1.msra.mxu0 %v470
    %995 = vmatprep.subr.mxu0 %v467
    %996 = vmatpush1.msra.mxu0 %v466
    %997 = vmatprep.subr.mxu0 %v463
    %998 = vmatpush1.msra.mxu0 %v462
    %999 = vmatprep.subr.mxu0 %v459
    %1000 = vmatpush1.msra.mxu0 %v458
    %1001 = vmatprep.subr.mxu0 %v455
    %1002 = vmatpush1.msra.mxu0 %v454
    %1003 = vmatprep.subr.mxu0 %v451
    %1004 = vmatpush1.msra.mxu0 %v450
    %1005 = vmatprep.subr.mxu0 %v447
    %1006 = vmatpush1.msra.mxu0 %v446
    %1007 = vmatprep.subr.mxu0 %v443
    %1008 = vmatpush1.msra.mxu0 %v442
    %1009 = vmatprep.subr.mxu0 %v439
    %1010 = vmatpush1.msra.mxu0 %v438
    %1011 = vmatprep.subr.mxu0 %v435
    %1012 = vmatpush1.msra.mxu0 %v434
    %1013 = vmatprep.subr.mxu0 %v431
    %1014 = vmatpush1.msra.mxu0 %v430
    %1015 = vmatprep.subr.mxu0 %v427
    %1016 = vmatpush1.msra.mxu0 %v426
    %1017 = vmatprep.subr.mxu0 %v423
    %1018 = vmatpush1.msra.mxu0 %v422
    %1019 = vmatprep.subr.mxu0 %v419
    %1020 = vmatpush1.msra.mxu0 %v418
    %1021 = vmatprep.subr.mxu0 0.0
    %1022 = vmatpush2.msra.mxu0 0.0
    %1023 = vmatprep.subr.mxu0 0.0
    %1024 = vmatpush2.msra.mxu0 0.0
    %1025 = vmatprep.subr.mxu0 0.0
    %1026 = vmatpush2.msra.mxu0 0.0
    %1027 = vmatprep.subr.mxu0 0.0
    %1028 = vmatpush2.msra.mxu0 0.0
    %1029 = vmatprep.subr.mxu0 0.0
    %1030 = vmatpush2.msra.mxu0 0.0
    %1031 = vmatprep.subr.mxu0 0.0
    %1032 = vmatpush2.msra.mxu0 0.0
    %1033 = vmatprep.subr.mxu0 0.0
    %1034 = vmatpush2.msra.mxu0 0.0
    %1035 = vmatprep.subr.mxu0 0.0
    %1036 = vmatpush2.msra.mxu0 0.0
    %1037 = vmatprep.subr.mxu0 0.0
    %1038 = vmatpush2.msra.mxu0 0.0
    %1039 = vmatprep.subr.mxu0 0.0
    %1040 = vmatpush2.msra.mxu0 0.0
    %1041 = vmatprep.subr.mxu0 0.0
    %1042 = vmatpush2.msra.mxu0 0.0
    %1043 = vmatprep.subr.mxu0 0.0
    %1044 = vmatpush2.msra.mxu0 0.0
    %1045 = vmatprep.subr.mxu0 0.0
    %1046 = vmatpush2.msra.mxu0 0.0
    %1047 = vmatprep.subr.mxu0 0.0
    %1048 = vmatpush2.msra.mxu0 0.0
    %1049 = vmatprep.subr.mxu0 0.0
    %1050 = vmatpush2.msra.mxu0 0.0
    %1051 = vmatprep.subr.mxu0 0.0
    %1052 = vmatpush2.msra.mxu0 0.0
    %1053 = vmatprep.mubr.f32.mxu0 0.0
    %1054 = vmatmul.mubr.f32.gmra.mxu0 %v983
    %v1055 = vpop.f32.mrf.mxu0
    %v1056 = vadd.f32 0.0, %v1055
    %v1057 = vpop.f32.mrf.mxu0
    %v1058 = vadd.f32 0.0, %v1057
    %1059 = vdwg.mxu0
    %1060 = vmatprep.subr.mxu0 %v481
    %1061 = vmatpush1.msra.mxu0 %v480
    %1062 = vmatprep.subr.mxu0 %v477
    %1063 = vmatpush1.msra.mxu0 %v476
    %1064 = vmatprep.subr.mxu0 %v473
    %1065 = vmatpush1.msra.mxu0 %v472
    %1066 = vmatprep.subr.mxu0 %v469
    %1067 = vmatpush1.msra.mxu0 %v468
    %1068 = vmatprep.subr.mxu0 %v465
    %1069 = vmatpush1.msra.mxu0 %v464
    %1070 = vmatprep.subr.mxu0 %v461
    %1071 = vmatpush1.msra.mxu0 %v460
    %1072 = vmatprep.subr.mxu0 %v457
    %1073 = vmatpush1.msra.mxu0 %v456
    %1074 = vmatprep.subr.mxu0 %v453
    %1075 = vmatpush1.msra.mxu0 %v452
    %1076 = vmatprep.subr.mxu0 %v449
    %1077 = vmatpush1.msra.mxu0 %v448
    %1078 = vmatprep.subr.mxu0 %v445
    %1079 = vmatpush1.msra.mxu0 %v444
    %1080 = vmatprep.subr.mxu0 %v441
    %1081 = vmatpush1.msra.mxu0 %v440
    %1082 = vmatprep.subr.mxu0 %v437
    %1083 = vmatpush1.msra.mxu0 %v436
    %1084 = vmatprep.subr.mxu0 %v433
    %1085 = vmatpush1.msra.mxu0 %v432
    %1086 = vmatprep.subr.mxu0 %v429
    %1087 = vmatpush1.msra.mxu0 %v428
    %1088 = vmatprep.subr.mxu0 %v425
    %1089 = vmatpush1.msra.mxu0 %v424
    %1090 = vmatprep.subr.mxu0 %v421
    %1091 = vmatpush1.msra.mxu0 %v420
    %1092 = vmatprep.subr.mxu0 0.0
    %1093 = vmatpush2.msra.mxu0 0.0
    %1094 = vmatprep.subr.mxu0 0.0
    %1095 = vmatpush2.msra.mxu0 0.0
    %1096 = vmatprep.subr.mxu0 0.0
    %1097 = vmatpush2.msra.mxu0 0.0
    %1098 = vmatprep.subr.mxu0 0.0
    %1099 = vmatpush2.msra.mxu0 0.0
    %1100 = vmatprep.subr.mxu0 0.0
    %1101 = vmatpush2.msra.mxu0 0.0
    %1102 = vmatprep.subr.mxu0 0.0
    %1103 = vmatpush2.msra.mxu0 0.0
    %1104 = vmatprep.subr.mxu0 0.0
    %1105 = vmatpush2.msra.mxu0 0.0
    %1106 = vmatprep.subr.mxu0 0.0
    %1107 = vmatpush2.msra.mxu0 0.0
    %1108 = vmatprep.subr.mxu0 0.0
    %1109 = vmatpush2.msra.mxu0 0.0
    %1110 = vmatprep.subr.mxu0 0.0
    %1111 = vmatpush2.msra.mxu0 0.0
    %1112 = vmatprep.subr.mxu0 0.0
    %1113 = vmatpush2.msra.mxu0 0.0
    %1114 = vmatprep.subr.mxu0 0.0
    %1115 = vmatpush2.msra.mxu0 0.0
    %1116 = vmatprep.subr.mxu0 0.0
    %1117 = vmatpush2.msra.mxu0 0.0
    %1118 = vmatprep.subr.mxu0 0.0
    %1119 = vmatpush2.msra.mxu0 0.0
    %1120 = vmatprep.subr.mxu0 0.0
    %1121 = vmatpush2.msra.mxu0 0.0
    %1122 = vmatprep.subr.mxu0 0.0
    %1123 = vmatpush2.msra.mxu0 0.0
    %1124 = vmatprep.mubr.f32.mxu0 0.0
    %1125 = vmatmul.mubr.f32.gmra.mxu0 %v983
    %v1126 = vpop.f32.mrf.mxu0
    %v1127 = vadd.f32 0.0, %v1126
    %v1128 = vpop.f32.mrf.mxu0
    %v1129 = vadd.f32 0.0, %v1128
    %1130 = vdwg.mxu0
    %v1131 = vadd.f32 %v985, %v1056
    %v1132 = vadd.f32 %v986, %v1058
    %v1133 = vadd.f32 %v987, %v1127
    %v1134 = vadd.f32 %v988, %v1129
    %v1135 = vmul.f32 %v1131, 0.5
    %v1136 = vtanh.pop %v1135
    %v1137 = vmul.f32 %v1136, 0.5
    %v1138 = vadd.f32 %v1137, 0.5
    %v1139 = vmul.f32 %v1132, 0.5
    %v1140 = vtanh.pop %v1139
    %v1141 = vmul.f32 %v1140, 0.5
    %v1142 = vadd.f32 %v1141, 0.5
    %v1143 = vtanh.pop %v1133
    %v1144 = vmul.f32 %v1134, 0.5
    %v1145 = vtanh.pop %v1144
    %v1146 = vmul.f32 %v1145, 0.5
    %v1147 = vadd.f32 %v1146, 0.5
    %v1148 = vmul.f32 %v1142, %v981
    %v1149 = vmul.f32 %v1138, %v1143
    %v1150 = vadd.f32 %v1148, %v1149
    %v1151 = vtanh.pop %v1150
    %v1152 = vmul.f32 %v1147, %v1151
    %s1153 = scalar_lea.vmem [#allocation2], 128
    %v1154 = vld [vmem:[%s1153] sm:$0xff]
    %v1155 = vld [vmem:[%s1153 + $0x8] sm:$0xff]
    %v1156 = vld [vmem:[%s1153 + $0x10] sm:$0xff]
    %v1157 = vld [vmem:[%s1153 + $0x18] sm:$0xff]
    %1158 = vmatprep.subr.mxu0 %v479
    %1159 = vmatpush1.msra.mxu0 %v478
    %1160 = vmatprep.subr.mxu0 %v475
    %1161 = vmatpush1.msra.mxu0 %v474
    %1162 = vmatprep.subr.mxu0 %v471
    %1163 = vmatpush1.msra.mxu0 %v470
    %1164 = vmatprep.subr.mxu0 %v467
    %1165 = vmatpush1.msra.mxu0 %v466
    %1166 = vmatprep.subr.mxu0 %v463
    %1167 = vmatpush1.msra.mxu0 %v462
    %1168 = vmatprep.subr.mxu0 %v459
    %1169 = vmatpush1.msra.mxu0 %v458
    %1170 = vmatprep.subr.mxu0 %v455
    %1171 = vmatpush1.msra.mxu0 %v454
    %1172 = vmatprep.subr.mxu0 %v451
    %1173 = vmatpush1.msra.mxu0 %v450
    %1174 = vmatprep.subr.mxu0 %v447
    %1175 = vmatpush1.msra.mxu0 %v446
    %1176 = vmatprep.subr.mxu0 %v443
    %1177 = vmatpush1.msra.mxu0 %v442
    %1178 = vmatprep.subr.mxu0 %v439
    %1179 = vmatpush1.msra.mxu0 %v438
    %1180 = vmatprep.subr.mxu0 %v435
    %1181 = vmatpush1.msra.mxu0 %v434
    %1182 = vmatprep.subr.mxu0 %v431
    %1183 = vmatpush1.msra.mxu0 %v430
    %1184 = vmatprep.subr.mxu0 %v427
    %1185 = vmatpush1.msra.mxu0 %v426
    %1186 = vmatprep.subr.mxu0 %v423
    %1187 = vmatpush1.msra.mxu0 %v422
    %1188 = vmatprep.subr.mxu0 %v419
    %1189 = vmatpush1.msra.mxu0 %v418
    %1190 = vmatprep.subr.mxu0 0.0
    %1191 = vmatpush2.msra.mxu0 0.0
    %1192 = vmatprep.subr.mxu0 0.0
    %1193 = vmatpush2.msra.mxu0 0.0
    %1194 = vmatprep.subr.mxu0 0.0
    %1195 = vmatpush2.msra.mxu0 0.0
    %1196 = vmatprep.subr.mxu0 0.0
    %1197 = vmatpush2.msra.mxu0 0.0
    %1198 = vmatprep.subr.mxu0 0.0
    %1199 = vmatpush2.msra.mxu0 0.0
    %1200 = vmatprep.subr.mxu0 0.0
    %1201 = vmatpush2.msra.mxu0 0.0
    %1202 = vmatprep.subr.mxu0 0.0
    %1203 = vmatpush2.msra.mxu0 0.0
    %1204 = vmatprep.subr.mxu0 0.0
    %1205 = vmatpush2.msra.mxu0 0.0
    %1206 = vmatprep.subr.mxu0 0.0
    %1207 = vmatpush2.msra.mxu0 0.0
    %1208 = vmatprep.subr.mxu0 0.0
    %1209 = vmatpush2.msra.mxu0 0.0
    %1210 = vmatprep.subr.mxu0 0.0
    %1211 = vmatpush2.msra.mxu0 0.0
    %1212 = vmatprep.subr.mxu0 0.0
    %1213 = vmatpush2.msra.mxu0 0.0
    %1214 = vmatprep.subr.mxu0 0.0
    %1215 = vmatpush2.msra.mxu0 0.0
    %1216 = vmatprep.subr.mxu0 0.0
    %1217 = vmatpush2.msra.mxu0 0.0
    %1218 = vmatprep.subr.mxu0 0.0
    %1219 = vmatpush2.msra.mxu0 0.0
    %1220 = vmatprep.subr.mxu0 0.0
    %1221 = vmatpush2.msra.mxu0 0.0
    %1222 = vmatprep.mubr.f32.mxu0 0.0
    %1223 = vmatmul.mubr.f32.gmra.mxu0 %v1152
    %v1224 = vpop.f32.mrf.mxu0
    %v1225 = vadd.f32 0.0, %v1224
    %v1226 = vpop.f32.mrf.mxu0
    %v1227 = vadd.f32 0.0, %v1226
    %1228 = vdwg.mxu0
    %1229 = vmatprep.subr.mxu0 %v481
    %1230 = vmatpush1.msra.mxu0 %v480
    %1231 = vmatprep.subr.mxu0 %v477
    %1232 = vmatpush1.msra.mxu0 %v476
    %1233 = vmatprep.subr.mxu0 %v473
    %1234 = vmatpush1.msra.mxu0 %v472
    %1235 = vmatprep.subr.mxu0 %v469
    %1236 = vmatpush1.msra.mxu0 %v468
    %1237 = vmatprep.subr.mxu0 %v465
    %1238 = vmatpush1.msra.mxu0 %v464
    %1239 = vmatprep.subr.mxu0 %v461
    %1240 = vmatpush1.msra.mxu0 %v460
    %1241 = vmatprep.subr.mxu0 %v457
    %1242 = vmatpush1.msra.mxu0 %v456
    %1243 = vmatprep.subr.mxu0 %v453
    %1244 = vmatpush1.msra.mxu0 %v452
    %1245 = vmatprep.subr.mxu0 %v449
    %1246 = vmatpush1.msra.mxu0 %v448
    %1247 = vmatprep.subr.mxu0 %v445
    %1248 = vmatpush1.msra.mxu0 %v444
    %1249 = vmatprep.subr.mxu0 %v441
    %1250 = vmatpush1.msra.mxu0 %v440
    %1251 = vmatprep.subr.mxu0 %v437
    %1252 = vmatpush1.msra.mxu0 %v436
    %1253 = vmatprep.subr.mxu0 %v433
    %1254 = vmatpush1.msra.mxu0 %v432
    %1255 = vmatprep.subr.mxu0 %v429
    %1256 = vmatpush1.msra.mxu0 %v428
    %1257 = vmatprep.subr.mxu0 %v425
    %1258 = vmatpush1.msra.mxu0 %v424
    %1259 = vmatprep.subr.mxu0 %v421
    %1260 = vmatpush1.msra.mxu0 %v420
    %1261 = vmatprep.subr.mxu0 0.0
    %1262 = vmatpush2.msra.mxu0 0.0
    %1263 = vmatprep.subr.mxu0 0.0
    %1264 = vmatpush2.msra.mxu0 0.0
    %1265 = vmatprep.subr.mxu0 0.0
    %1266 = vmatpush2.msra.mxu0 0.0
    %1267 = vmatprep.subr.mxu0 0.0
    %1268 = vmatpush2.msra.mxu0 0.0
    %1269 = vmatprep.subr.mxu0 0.0
    %1270 = vmatpush2.msra.mxu0 0.0
    %1271 = vmatprep.subr.mxu0 0.0
    %1272 = vmatpush2.msra.mxu0 0.0
    %1273 = vmatprep.subr.mxu0 0.0
    %1274 = vmatpush2.msra.mxu0 0.0
    %1275 = vmatprep.subr.mxu0 0.0
    %1276 = vmatpush2.msra.mxu0 0.0
    %1277 = vmatprep.subr.mxu0 0.0
    %1278 = vmatpush2.msra.mxu0 0.0
    %1279 = vmatprep.subr.mxu0 0.0
    %1280 = vmatpush2.msra.mxu0 0.0
    %1281 = vmatprep.subr.mxu0 0.0
    %1282 = vmatpush2.msra.mxu0 0.0
    %1283 = vmatprep.subr.mxu0 0.0
    %1284 = vmatpush2.msra.mxu0 0.0
    %1285 = vmatprep.subr.mxu0 0.0
    %1286 = vmatpush2.msra.mxu0 0.0
    %1287 = vmatprep.subr.mxu0 0.0
    %1288 = vmatpush2.msra.mxu0 0.0
    %1289 = vmatprep.subr.mxu0 0.0
    %1290 = vmatpush2.msra.mxu0 0.0
    %1291 = vmatprep.subr.mxu0 0.0
    %1292 = vmatpush2.msra.mxu0 0.0
    %1293 = vmatprep.mubr.f32.mxu0 0.0
    %1294 = vmatmul.mubr.f32.gmra.mxu0 %v1152
    %v1295 = vpop.f32.mrf.mxu0
    %v1296 = vadd.f32 0.0, %v1295
    %v1297 = vpop.f32.mrf.mxu0
    %v1298 = vadd.f32 0.0, %v1297
    %1299 = vdwg.mxu0
    %v1300 = vadd.f32 %v1154, %v1225
    %v1301 = vadd.f32 %v1155, %v1227
    %v1302 = vadd.f32 %v1156, %v1296
    %v1303 = vadd.f32 %v1157, %v1298
    %v1304 = vmul.f32 %v1300, 0.5
    %v1305 = vtanh.pop %v1304
    %v1306 = vmul.f32 %v1305, 0.5
    %v1307 = vadd.f32 %v1306, 0.5
    %v1308 = vmul.f32 %v1301, 0.5
    %v1309 = vtanh.pop %v1308
    %v1310 = vmul.f32 %v1309, 0.5
    %v1311 = vadd.f32 %v1310, 0.5
    %v1312 = vtanh.pop %v1302
    %v1313 = vmul.f32 %v1303, 0.5
    %v1314 = vtanh.pop %v1313
    %v1315 = vmul.f32 %v1314, 0.5
    %v1316 = vadd.f32 %v1315, 0.5
    %v1317 = vmul.f32 %v1311, %v1150
    %v1318 = vmul.f32 %v1307, %v1312
    %v1319 = vadd.f32 %v1317, %v1318
    %v1320 = vtanh.pop %v1319
    %v1321 = vmul.f32 %v1316, %v1320
    %s1322 = scalar_lea.vmem [#allocation2], 160
    %v1323 = vld [vmem:[%s1322] sm:$0xff]
    %v1324 = vld [vmem:[%s1322 + $0x8] sm:$0xff]
    %v1325 = vld [vmem:[%s1322 + $0x10] sm:$0xff]
    %v1326 = vld [vmem:[%s1322 + $0x18] sm:$0xff]
    %1327 = vmatprep.subr.mxu0 %v479
    %1328 = vmatpush1.msra.mxu0 %v478
    %1329 = vmatprep.subr.mxu0 %v475
    %1330 = vmatpush1.msra.mxu0 %v474
    %1331 = vmatprep.subr.mxu0 %v471
    %1332 = vmatpush1.msra.mxu0 %v470
    %1333 = vmatprep.subr.mxu0 %v467
    %1334 = vmatpush1.msra.mxu0 %v466
    %1335 = vmatprep.subr.mxu0 %v463
    %1336 = vmatpush1.msra.mxu0 %v462
    %1337 = vmatprep.subr.mxu0 %v459
    %1338 = vmatpush1.msra.mxu0 %v458
    %1339 = vmatprep.subr.mxu0 %v455
    %1340 = vmatpush1.msra.mxu0 %v454
    %1341 = vmatprep.subr.mxu0 %v451
    %1342 = vmatpush1.msra.mxu0 %v450
    %1343 = vmatprep.subr.mxu0 %v447
    %1344 = vmatpush1.msra.mxu0 %v446
    %1345 = vmatprep.subr.mxu0 %v443
    %1346 = vmatpush1.msra.mxu0 %v442
    %1347 = vmatprep.subr.mxu0 %v439
    %1348 = vmatpush1.msra.mxu0 %v438
    %1349 = vmatprep.subr.mxu0 %v435
    %1350 = vmatpush1.msra.mxu0 %v434
    %1351 = vmatprep.subr.mxu0 %v431
    %1352 = vmatpush1.msra.mxu0 %v430
    %1353 = vmatprep.subr.mxu0 %v427
    %1354 = vmatpush1.msra.mxu0 %v426
    %1355 = vmatprep.subr.mxu0 %v423
    %1356 = vmatpush1.msra.mxu0 %v422
    %1357 = vmatprep.subr.mxu0 %v419
    %1358 = vmatpush1.msra.mxu0 %v418
    %1359 = vmatprep.subr.mxu0 0.0
    %1360 = vmatpush2.msra.mxu0 0.0
    %1361 = vmatprep.subr.mxu0 0.0
    %1362 = vmatpush2.msra.mxu0 0.0
    %1363 = vmatprep.subr.mxu0 0.0
    %1364 = vmatpush2.msra.mxu0 0.0
    %1365 = vmatprep.subr.mxu0 0.0
    %1366 = vmatpush2.msra.mxu0 0.0
    %1367 = vmatprep.subr.mxu0 0.0
    %1368 = vmatpush2.msra.mxu0 0.0
    %1369 = vmatprep.subr.mxu0 0.0
    %1370 = vmatpush2.msra.mxu0 0.0
    %1371 = vmatprep.subr.mxu0 0.0
    %1372 = vmatpush2.msra.mxu0 0.0
    %1373 = vmatprep.subr.mxu0 0.0
    %1374 = vmatpush2.msra.mxu0 0.0
    %1375 = vmatprep.subr.mxu0 0.0
    %1376 = vmatpush2.msra.mxu0 0.0
    %1377 = vmatprep.subr.mxu0 0.0
    %1378 = vmatpush2.msra.mxu0 0.0
    %1379 = vmatprep.subr.mxu0 0.0
    %1380 = vmatpush2.msra.mxu0 0.0
    %1381 = vmatprep.subr.mxu0 0.0
    %1382 = vmatpush2.msra.mxu0 0.0
    %1383 = vmatprep.subr.mxu0 0.0
    %1384 = vmatpush2.msra.mxu0 0.0
    %1385 = vmatprep.subr.mxu0 0.0
    %1386 = vmatpush2.msra.mxu0 0.0
    %1387 = vmatprep.subr.mxu0 0.0
    %1388 = vmatpush2.msra.mxu0 0.0
    %1389 = vmatprep.subr.mxu0 0.0
    %1390 = vmatpush2.msra.mxu0 0.0
    %1391 = vmatprep.mubr.f32.mxu0 0.0
    %1392 = vmatmul.mubr.f32.gmra.mxu0 %v1321
    %v1393 = vpop.f32.mrf.mxu0
    %v1394 = vadd.f32 0.0, %v1393
    %v1395 = vpop.f32.mrf.mxu0
    %v1396 = vadd.f32 0.0, %v1395
    %1397 = vdwg.mxu0
    %1398 = vmatprep.subr.mxu0 %v481
    %1399 = vmatpush1.msra.mxu0 %v480
    %1400 = vmatprep.subr.mxu0 %v477
    %1401 = vmatpush1.msra.mxu0 %v476
    %1402 = vmatprep.subr.mxu0 %v473
    %1403 = vmatpush1.msra.mxu0 %v472
    %1404 = vmatprep.subr.mxu0 %v469
    %1405 = vmatpush1.msra.mxu0 %v468
    %1406 = vmatprep.subr.mxu0 %v465
    %1407 = vmatpush1.msra.mxu0 %v464
    %1408 = vmatprep.subr.mxu0 %v461
    %1409 = vmatpush1.msra.mxu0 %v460
    %1410 = vmatprep.subr.mxu0 %v457
    %1411 = vmatpush1.msra.mxu0 %v456
    %1412 = vmatprep.subr.mxu0 %v453
    %1413 = vmatpush1.msra.mxu0 %v452
    %1414 = vmatprep.subr.mxu0 %v449
    %1415 = vmatpush1.msra.mxu0 %v448
    %1416 = vmatprep.subr.mxu0 %v445
    %1417 = vmatpush1.msra.mxu0 %v444
    %1418 = vmatprep.subr.mxu0 %v441
    %1419 = vmatpush1.msra.mxu0 %v440
    %1420 = vmatprep.subr.mxu0 %v437
    %1421 = vmatpush1.msra.mxu0 %v436
    %1422 = vmatprep.subr.mxu0 %v433
    %1423 = vmatpush1.msra.mxu0 %v432
    %1424 = vmatprep.subr.mxu0 %v429
    %1425 = vmatpush1.msra.mxu0 %v428
    %1426 = vmatprep.subr.mxu0 %v425
    %1427 = vmatpush1.msra.mxu0 %v424
    %1428 = vmatprep.subr.mxu0 %v421
    %1429 = vmatpush1.msra.mxu0 %v420
    %1430 = vmatprep.subr.mxu0 0.0
    %1431 = vmatpush2.msra.mxu0 0.0
    %1432 = vmatprep.subr.mxu0 0.0
    %1433 = vmatpush2.msra.mxu0 0.0
    %1434 = vmatprep.subr.mxu0 0.0
    %1435 = vmatpush2.msra.mxu0 0.0
    %1436 = vmatprep.subr.mxu0 0.0
    %1437 = vmatpush2.msra.mxu0 0.0
    %1438 = vmatprep.subr.mxu0 0.0
    %1439 = vmatpush2.msra.mxu0 0.0
    %1440 = vmatprep.subr.mxu0 0.0
    %1441 = vmatpush2.msra.mxu0 0.0
    %1442 = vmatprep.subr.mxu0 0.0
    %1443 = vmatpush2.msra.mxu0 0.0
    %1444 = vmatprep.subr.mxu0 0.0
    %1445 = vmatpush2.msra.mxu0 0.0
    %1446 = vmatprep.subr.mxu0 0.0
    %1447 = vmatpush2.msra.mxu0 0.0
    %1448 = vmatprep.subr.mxu0 0.0
    %1449 = vmatpush2.msra.mxu0 0.0
    %1450 = vmatprep.subr.mxu0 0.0
    %1451 = vmatpush2.msra.mxu0 0.0
    %1452 = vmatprep.subr.mxu0 0.0
    %1453 = vmatpush2.msra.mxu0 0.0
    %1454 = vmatprep.subr.mxu0 0.0
    %1455 = vmatpush2.msra.mxu0 0.0
    %1456 = vmatprep.subr.mxu0 0.0
    %1457 = vmatpush2.msra.mxu0 0.0
    %1458 = vmatprep.subr.mxu0 0.0
    %1459 = vmatpush2.msra.mxu0 0.0
    %1460 = vmatprep.subr.mxu0 0.0
    %1461 = vmatpush2.msra.mxu0 0.0
    %1462 = vmatprep.mubr.f32.mxu0 0.0
    %1463 = vmatmul.mubr.f32.gmra.mxu0 %v1321
    %v1464 = vpop.f32.mrf.mxu0
    %v1465 = vadd.f32 0.0, %v1464
    %v1466 = vpop.f32.mrf.mxu0
    %v1467 = vadd.f32 0.0, %v1466
    %1468 = vdwg.mxu0
    %v1469 = vadd.f32 %v1323, %v1394
    %v1470 = vadd.f32 %v1324, %v1396
    %v1471 = vadd.f32 %v1325, %v1465
    %v1472 = vadd.f32 %v1326, %v1467
    %v1473 = vmul.f32 %v1469, 0.5
    %v1474 = vtanh.pop %v1473
    %v1475 = vmul.f32 %v1474, 0.5
    %v1476 = vadd.f32 %v1475, 0.5
    %v1477 = vmul.f32 %v1470, 0.5
    %v1478 = vtanh.pop %v1477
    %v1479 = vmul.f32 %v1478, 0.5
    %v1480 = vadd.f32 %v1479, 0.5
    %v1481 = vtanh.pop %v1471
    %v1482 = vmul.f32 %v1472, 0.5
    %v1483 = vtanh.pop %v1482
    %v1484 = vmul.f32 %v1483, 0.5
    %v1485 = vadd.f32 %v1484, 0.5
    %v1486 = vmul.f32 %v1480, %v1319
    %v1487 = vmul.f32 %v1476, %v1481
    %v1488 = vadd.f32 %v1486, %v1487
    %v1489 = vtanh.pop %v1488
    %v1490 = vmul.f32 %v1485, %v1489
    %s1491 = scalar_lea.vmem [#allocation2], 192
    %v1492 = vld [vmem:[%s1491] sm:$0xff]
    %v1493 = vld [vmem:[%s1491 + $0x8] sm:$0xff]
    %v1494 = vld [vmem:[%s1491 + $0x10] sm:$0xff]
    %v1495 = vld [vmem:[%s1491 + $0x18] sm:$0xff]
    %1496 = vmatprep.subr.mxu0 %v479
    %1497 = vmatpush1.msra.mxu0 %v478
    %1498 = vmatprep.subr.mxu0 %v475
    %1499 = vmatpush1.msra.mxu0 %v474
    %1500 = vmatprep.subr.mxu0 %v471
    %1501 = vmatpush1.msra.mxu0 %v470
    %1502 = vmatprep.subr.mxu0 %v467
    %1503 = vmatpush1.msra.mxu0 %v466
    %1504 = vmatprep.subr.mxu0 %v463
    %1505 = vmatpush1.msra.mxu0 %v462
    %1506 = vmatprep.subr.mxu0 %v459
    %1507 = vmatpush1.msra.mxu0 %v458
    %1508 = vmatprep.subr.mxu0 %v455
    %1509 = vmatpush1.msra.mxu0 %v454
    %1510 = vmatprep.subr.mxu0 %v451
    %1511 = vmatpush1.msra.mxu0 %v450
    %1512 = vmatprep.subr.mxu0 %v447
    %1513 = vmatpush1.msra.mxu0 %v446
    %1514 = vmatprep.subr.mxu0 %v443
    %1515 = vmatpush1.msra.mxu0 %v442
    %1516 = vmatprep.subr.mxu0 %v439
    %1517 = vmatpush1.msra.mxu0 %v438
    %1518 = vmatprep.subr.mxu0 %v435
    %1519 = vmatpush1.msra.mxu0 %v434
    %1520 = vmatprep.subr.mxu0 %v431
    %1521 = vmatpush1.msra.mxu0 %v430
    %1522 = vmatprep.subr.mxu0 %v427
    %1523 = vmatpush1.msra.mxu0 %v426
    %1524 = vmatprep.subr.mxu0 %v423
    %1525 = vmatpush1.msra.mxu0 %v422
    %1526 = vmatprep.subr.mxu0 %v419
    %1527 = vmatpush1.msra.mxu0 %v418
    %1528 = vmatprep.subr.mxu0 0.0
    %1529 = vmatpush2.msra.mxu0 0.0
    %1530 = vmatprep.subr.mxu0 0.0
    %1531 = vmatpush2.msra.mxu0 0.0
    %1532 = vmatprep.subr.mxu0 0.0
    %1533 = vmatpush2.msra.mxu0 0.0
    %1534 = vmatprep.subr.mxu0 0.0
    %1535 = vmatpush2.msra.mxu0 0.0
    %1536 = vmatprep.subr.mxu0 0.0
    %1537 = vmatpush2.msra.mxu0 0.0
    %1538 = vmatprep.subr.mxu0 0.0
    %1539 = vmatpush2.msra.mxu0 0.0
    %1540 = vmatprep.subr.mxu0 0.0
    %1541 = vmatpush2.msra.mxu0 0.0
    %1542 = vmatprep.subr.mxu0 0.0
    %1543 = vmatpush2.msra.mxu0 0.0
    %1544 = vmatprep.subr.mxu0 0.0
    %1545 = vmatpush2.msra.mxu0 0.0
    %1546 = vmatprep.subr.mxu0 0.0
    %1547 = vmatpush2.msra.mxu0 0.0
    %1548 = vmatprep.subr.mxu0 0.0
    %1549 = vmatpush2.msra.mxu0 0.0
    %1550 = vmatprep.subr.mxu0 0.0
    %1551 = vmatpush2.msra.mxu0 0.0
    %1552 = vmatprep.subr.mxu0 0.0
    %1553 = vmatpush2.msra.mxu0 0.0
    %1554 = vmatprep.subr.mxu0 0.0
    %1555 = vmatpush2.msra.mxu0 0.0
    %1556 = vmatprep.subr.mxu0 0.0
    %1557 = vmatpush2.msra.mxu0 0.0
    %1558 = vmatprep.subr.mxu0 0.0
    %1559 = vmatpush2.msra.mxu0 0.0
    %1560 = vmatprep.mubr.f32.mxu0 0.0
    %1561 = vmatmul.mubr.f32.gmra.mxu0 %v1490
    %v1562 = vpop.f32.mrf.mxu0
    %v1563 = vadd.f32 0.0, %v1562
    %v1564 = vpop.f32.mrf.mxu0
    %v1565 = vadd.f32 0.0, %v1564
    %1566 = vdwg.mxu0
    %1567 = vmatprep.subr.mxu0 %v481
    %1568 = vmatpush1.msra.mxu0 %v480
    %1569 = vmatprep.subr.mxu0 %v477
    %1570 = vmatpush1.msra.mxu0 %v476
    %1571 = vmatprep.subr.mxu0 %v473
    %1572 = vmatpush1.msra.mxu0 %v472
    %1573 = vmatprep.subr.mxu0 %v469
    %1574 = vmatpush1.msra.mxu0 %v468
    %1575 = vmatprep.subr.mxu0 %v465
    %1576 = vmatpush1.msra.mxu0 %v464
    %1577 = vmatprep.subr.mxu0 %v461
    %1578 = vmatpush1.msra.mxu0 %v460
    %1579 = vmatprep.subr.mxu0 %v457
    %1580 = vmatpush1.msra.mxu0 %v456
    %1581 = vmatprep.subr.mxu0 %v453
    %1582 = vmatpush1.msra.mxu0 %v452
    %1583 = vmatprep.subr.mxu0 %v449
    %1584 = vmatpush1.msra.mxu0 %v448
    %1585 = vmatprep.subr.mxu0 %v445
    %1586 = vmatpush1.msra.mxu0 %v444
    %1587 = vmatprep.subr.mxu0 %v441
    %1588 = vmatpush1.msra.mxu0 %v440
    %1589 = vmatprep.subr.mxu0 %v437
    %1590 = vmatpush1.msra.mxu0 %v436
    %1591 = vmatprep.subr.mxu0 %v433
    %1592 = vmatpush1.msra.mxu0 %v432
    %1593 = vmatprep.subr.mxu0 %v429
    %1594 = vmatpush1.msra.mxu0 %v428
    %1595 = vmatprep.subr.mxu0 %v425
    %1596 = vmatpush1.msra.mxu0 %v424
    %1597 = vmatprep.subr.mxu0 %v421
    %1598 = vmatpush1.msra.mxu0 %v420
    %1599 = vmatprep.subr.mxu0 0.0
    %1600 = vmatpush2.msra.mxu0 0.0
    %1601 = vmatprep.subr.mxu0 0.0
    %1602 = vmatpush2.msra.mxu0 0.0
    %1603 = vmatprep.subr.mxu0 0.0
    %1604 = vmatpush2.msra.mxu0 0.0
    %1605 = vmatprep.subr.mxu0 0.0
    %1606 = vmatpush2.msra.mxu0 0.0
    %1607 = vmatprep.subr.mxu0 0.0
    %1608 = vmatpush2.msra.mxu0 0.0
    %1609 = vmatprep.subr.mxu0 0.0
    %1610 = vmatpush2.msra.mxu0 0.0
    %1611 = vmatprep.subr.mxu0 0.0
    %1612 = vmatpush2.msra.mxu0 0.0
    %1613 = vmatprep.subr.mxu0 0.0
    %1614 = vmatpush2.msra.mxu0 0.0
    %1615 = vmatprep.subr.mxu0 0.0
    %1616 = vmatpush2.msra.mxu0 0.0
    %1617 = vmatprep.subr.mxu0 0.0
    %1618 = vmatpush2.msra.mxu0 0.0
    %1619 = vmatprep.subr.mxu0 0.0
    %1620 = vmatpush2.msra.mxu0 0.0
    %1621 = vmatprep.subr.mxu0 0.0
    %1622 = vmatpush2.msra.mxu0 0.0
    %1623 = vmatprep.subr.mxu0 0.0
    %1624 = vmatpush2.msra.mxu0 0.0
    %1625 = vmatprep.subr.mxu0 0.0
    %1626 = vmatpush2.msra.mxu0 0.0
    %1627 = vmatprep.subr.mxu0 0.0
    %1628 = vmatpush2.msra.mxu0 0.0
    %1629 = vmatprep.subr.mxu0 0.0
    %1630 = vmatpush2.msra.mxu0 0.0
    %1631 = vmatprep.mubr.f32.mxu0 0.0
    %1632 = vmatmul.mubr.f32.gmra.mxu0 %v1490
    %v1633 = vpop.f32.mrf.mxu0
    %v1634 = vadd.f32 0.0, %v1633
    %v1635 = vpop.f32.mrf.mxu0
    %v1636 = vadd.f32 0.0, %v1635
    %1637 = vdwg.mxu0
    %v1638 = vadd.f32 %v1492, %v1563
    %v1639 = vadd.f32 %v1493, %v1565
    %v1640 = vadd.f32 %v1494, %v1634
    %v1641 = vadd.f32 %v1495, %v1636
    %v1642 = vmul.f32 %v1638, 0.5
    %v1643 = vtanh.pop %v1642
    %v1644 = vmul.f32 %v1643, 0.5
    %v1645 = vadd.f32 %v1644, 0.5
    %v1646 = vmul.f32 %v1639, 0.5
    %v1647 = vtanh.pop %v1646
    %v1648 = vmul.f32 %v1647, 0.5
    %v1649 = vadd.f32 %v1648, 0.5
    %v1650 = vtanh.pop %v1640
    %v1651 = vmul.f32 %v1641, 0.5
    %v1652 = vtanh.pop %v1651
    %v1653 = vmul.f32 %v1652, 0.5
    %v1654 = vadd.f32 %v1653, 0.5
    %v1655 = vmul.f32 %v1649, %v1488
    %v1656 = vmul.f32 %v1645, %v1650
    %v1657 = vadd.f32 %v1655, %v1656
    %v1658 = vtanh.pop %v1657
    %v1659 = vmul.f32 %v1654, %v1658
    %s1660 = scalar_lea.vmem [#allocation2], 224
    %v1661 = vld [vmem:[%s1660] sm:$0xff]
    %v1662 = vld [vmem:[%s1660 + $0x8] sm:$0xff]
    %v1663 = vld [vmem:[%s1660 + $0x10] sm:$0xff]
    %v1664 = vld [vmem:[%s1660 + $0x18] sm:$0xff]
    %1665 = vmatprep.subr.mxu0 %v479
    %1666 = vmatpush1.msra.mxu0 %v478
    %1667 = vmatprep.subr.mxu0 %v475
    %1668 = vmatpush1.msra.mxu0 %v474
    %1669 = vmatprep.subr.mxu0 %v471
    %1670 = vmatpush1.msra.mxu0 %v470
    %1671 = vmatprep.subr.mxu0 %v467
    %1672 = vmatpush1.msra.mxu0 %v466
    %1673 = vmatprep.subr.mxu0 %v463
    %1674 = vmatpush1.msra.mxu0 %v462
    %1675 = vmatprep.subr.mxu0 %v459
    %1676 = vmatpush1.msra.mxu0 %v458
    %1677 = vmatprep.subr.mxu0 %v455
    %1678 = vmatpush1.msra.mxu0 %v454
    %1679 = vmatprep.subr.mxu0 %v451
    %1680 = vmatpush1.msra.mxu0 %v450
    %1681 = vmatprep.subr.mxu0 %v447
    %1682 = vmatpush1.msra.mxu0 %v446
    %1683 = vmatprep.subr.mxu0 %v443
    %1684 = vmatpush1.msra.mxu0 %v442
    %1685 = vmatprep.subr.mxu0 %v439
    %1686 = vmatpush1.msra.mxu0 %v438
    %1687 = vmatprep.subr.mxu0 %v435
    %1688 = vmatpush1.msra.mxu0 %v434
    %1689 = vmatprep.subr.mxu0 %v431
    %1690 = vmatpush1.msra.mxu0 %v430
    %1691 = vmatprep.subr.mxu0 %v427
    %1692 = vmatpush1.msra.mxu0 %v426
    %1693 = vmatprep.subr.mxu0 %v423
    %1694 = vmatpush1.msra.mxu0 %v422
    %1695 = vmatprep.subr.mxu0 %v419
    %1696 = vmatpush1.msra.mxu0 %v418
    %1697 = vmatprep.subr.mxu0 0.0
    %1698 = vmatpush2.msra.mxu0 0.0
    %1699 = vmatprep.subr.mxu0 0.0
    %1700 = vmatpush2.msra.mxu0 0.0
    %1701 = vmatprep.subr.mxu0 0.0
    %1702 = vmatpush2.msra.mxu0 0.0
    %1703 = vmatprep.subr.mxu0 0.0
    %1704 = vmatpush2.msra.mxu0 0.0
    %1705 = vmatprep.subr.mxu0 0.0
    %1706 = vmatpush2.msra.mxu0 0.0
    %1707 = vmatprep.subr.mxu0 0.0
    %1708 = vmatpush2.msra.mxu0 0.0
    %1709 = vmatprep.subr.mxu0 0.0
    %1710 = vmatpush2.msra.mxu0 0.0
    %1711 = vmatprep.subr.mxu0 0.0
    %1712 = vmatpush2.msra.mxu0 0.0
    %1713 = vmatprep.subr.mxu0 0.0
    %1714 = vmatpush2.msra.mxu0 0.0
    %1715 = vmatprep.subr.mxu0 0.0
    %1716 = vmatpush2.msra.mxu0 0.0
    %1717 = vmatprep.subr.mxu0 0.0
    %1718 = vmatpush2.msra.mxu0 0.0
    %1719 = vmatprep.subr.mxu0 0.0
    %1720 = vmatpush2.msra.mxu0 0.0
    %1721 = vmatprep.subr.mxu0 0.0
    %1722 = vmatpush2.msra.mxu0 0.0
    %1723 = vmatprep.subr.mxu0 0.0
    %1724 = vmatpush2.msra.mxu0 0.0
    %1725 = vmatprep.subr.mxu0 0.0
    %1726 = vmatpush2.msra.mxu0 0.0
    %1727 = vmatprep.subr.mxu0 0.0
    %1728 = vmatpush2.msra.mxu0 0.0
    %1729 = vmatprep.mubr.f32.mxu0 0.0
    %1730 = vmatmul.mubr.f32.gmra.mxu0 %v1659
    %v1731 = vpop.f32.mrf.mxu0
    %v1732 = vadd.f32 0.0, %v1731
    %v1733 = vpop.f32.mrf.mxu0
    %v1734 = vadd.f32 0.0, %v1733
    %1735 = vdwg.mxu0
    %1736 = vmatprep.subr.mxu0 %v481
    %1737 = vmatpush1.msra.mxu0 %v480
    %1738 = vmatprep.subr.mxu0 %v477
    %1739 = vmatpush1.msra.mxu0 %v476
    %1740 = vmatprep.subr.mxu0 %v473
    %1741 = vmatpush1.msra.mxu0 %v472
    %1742 = vmatprep.subr.mxu0 %v469
    %1743 = vmatpush1.msra.mxu0 %v468
    %1744 = vmatprep.subr.mxu0 %v465
    %1745 = vmatpush1.msra.mxu0 %v464
    %1746 = vmatprep.subr.mxu0 %v461
    %1747 = vmatpush1.msra.mxu0 %v460
    %1748 = vmatprep.subr.mxu0 %v457
    %1749 = vmatpush1.msra.mxu0 %v456
    %1750 = vmatprep.subr.mxu0 %v453
    %1751 = vmatpush1.msra.mxu0 %v452
    %1752 = vmatprep.subr.mxu0 %v449
    %1753 = vmatpush1.msra.mxu0 %v448
    %1754 = vmatprep.subr.mxu0 %v445
    %1755 = vmatpush1.msra.mxu0 %v444
    %1756 = vmatprep.subr.mxu0 %v441
    %1757 = vmatpush1.msra.mxu0 %v440
    %1758 = vmatprep.subr.mxu0 %v437
    %1759 = vmatpush1.msra.mxu0 %v436
    %1760 = vmatprep.subr.mxu0 %v433
    %1761 = vmatpush1.msra.mxu0 %v432
    %1762 = vmatprep.subr.mxu0 %v429
    %1763 = vmatpush1.msra.mxu0 %v428
    %1764 = vmatprep.subr.mxu0 %v425
    %1765 = vmatpush1.msra.mxu0 %v424
    %1766 = vmatprep.subr.mxu0 %v421
    %1767 = vmatpush1.msra.mxu0 %v420
    %1768 = vmatprep.subr.mxu0 0.0
    %1769 = vmatpush2.msra.mxu0 0.0
    %1770 = vmatprep.subr.mxu0 0.0
    %1771 = vmatpush2.msra.mxu0 0.0
    %1772 = vmatprep.subr.mxu0 0.0
    %1773 = vmatpush2.msra.mxu0 0.0
    %1774 = vmatprep.subr.mxu0 0.0
    %1775 = vmatpush2.msra.mxu0 0.0
    %1776 = vmatprep.subr.mxu0 0.0
    %1777 = vmatpush2.msra.mxu0 0.0
    %1778 = vmatprep.subr.mxu0 0.0
    %1779 = vmatpush2.msra.mxu0 0.0
    %1780 = vmatprep.subr.mxu0 0.0
    %1781 = vmatpush2.msra.mxu0 0.0
    %1782 = vmatprep.subr.mxu0 0.0
    %1783 = vmatpush2.msra.mxu0 0.0
    %1784 = vmatprep.subr.mxu0 0.0
    %1785 = vmatpush2.msra.mxu0 0.0
    %1786 = vmatprep.subr.mxu0 0.0
    %1787 = vmatpush2.msra.mxu0 0.0
    %1788 = vmatprep.subr.mxu0 0.0
    %1789 = vmatpush2.msra.mxu0 0.0
    %1790 = vmatprep.subr.mxu0 0.0
    %1791 = vmatpush2.msra.mxu0 0.0
    %1792 = vmatprep.subr.mxu0 0.0
    %1793 = vmatpush2.msra.mxu0 0.0
    %1794 = vmatprep.subr.mxu0 0.0
    %1795 = vmatpush2.msra.mxu0 0.0
    %1796 = vmatprep.subr.mxu0 0.0
    %1797 = vmatpush2.msra.mxu0 0.0
    %1798 = vmatprep.subr.mxu0 0.0
    %1799 = vmatpush2.msra.mxu0 0.0
    %1800 = vmatprep.mubr.f32.mxu0 0.0
    %1801 = vmatmul.mubr.f32.gmra.mxu0 %v1659
    %v1802 = vpop.f32.mrf.mxu0
    %v1803 = vadd.f32 0.0, %v1802
    %v1804 = vpop.f32.mrf.mxu0
    %v1805 = vadd.f32 0.0, %v1804
    %1806 = vdwg.mxu0
    %v1807 = vadd.f32 %v1661, %v1732
    %v1808 = vadd.f32 %v1662, %v1734
    %v1809 = vadd.f32 %v1663, %v1803
    %v1810 = vadd.f32 %v1664, %v1805
    %v1811 = vmul.f32 %v1807, 0.5
    %v1812 = vtanh.pop %v1811
    %v1813 = vmul.f32 %v1812, 0.5
    %v1814 = vadd.f32 %v1813, 0.5
    %v1815 = vmul.f32 %v1808, 0.5
    %v1816 = vtanh.pop %v1815
    %v1817 = vmul.f32 %v1816, 0.5
    %v1818 = vadd.f32 %v1817, 0.5
    %v1819 = vtanh.pop %v1809
    %v1820 = vmul.f32 %v1810, 0.5
    %v1821 = vtanh.pop %v1820
    %v1822 = vmul.f32 %v1821, 0.5
    %v1823 = vadd.f32 %v1822, 0.5
    %v1824 = vmul.f32 %v1818, %v1657
    %v1825 = vmul.f32 %v1814, %v1819
    %v1826 = vadd.f32 %v1824, %v1825
    %v1827 = vtanh.pop %v1826
    %v1828 = vmul.f32 %v1823, %v1827
    %1829 = vst [vmem:[#allocation9] sm:$0xff] %v1828
    %1830 = vst [vmem:[#allocation10] sm:$0xff] %v1826
    // Predicated region
    $region30: #{tpu_custom_call.1} parent=1 // pred_check
      _
    $region31: #{tpu_custom_call.1} parent=1 // pred_check_branch
      %1832 = sbr.rel (0) target = $region33
    $region32: #{tpu_custom_call.1} parent=1 // pred_region
      %s1834 = ssub.s32 128, 128
      %1835 = vsyncadd [#allocation5], %s1834
      %s1837 = sshll.u32 [#allocation9], 4
      %s1838 = int_to_ptr.vmem [resolvable:$true] %s1837
      %1840 = dma.vmem_to_hbm [thread:$0]  %s1838, 128, %s4, [#allocation5]
    $region33: #{tpu_custom_call.1} parent=1 // pred_fallthru
      _
    // Predicated region
    $region34: #{tpu_custom_call.1} parent=1 // pred_check
      _
    $region35: #{tpu_custom_call.1} parent=1 // pred_check_branch
      %1842 = sbr.rel (0) target = $region37
    $region36: #{tpu_custom_call.1} parent=1 // pred_region
      %s1844 = ssub.s32 128, 128
      %1845 = vsyncadd [#allocation11], %s1844
      %s1847 = sshll.u32 [#allocation10], 4
      %s1848 = int_to_ptr.vmem [resolvable:$true] %s1847
      %1850 = dma.vmem_to_hbm [thread:$0]  %s1848, 128, %s5, [#allocation11]
    $region37: #{tpu_custom_call.1} parent=1 // pred_fallthru
      _
    // Predicated region
    $region38: #{tpu_custom_call.1} parent=1 // pred_check
      _
    $region39: #{tpu_custom_call.1} parent=1 // pred_check_branch
      %1852 = sbr.rel (0) target = $region41
    $region40: #{tpu_custom_call.1} parent=1 // pred_region
      %1853 = dma.done [#allocation5], 128
    $region41: #{tpu_custom_call.1} parent=1 // pred_fallthru
      _
    // Predicated region
    $region42: #{tpu_custom_call.1} parent=1 // pred_check
      _
    $region43: #{tpu_custom_call.1} parent=1 // pred_check_branch
      %1855 = sbr.rel (0) target = $region45
    $region44: #{tpu_custom_call.1} parent=1 // pred_region
      %1856 = dma.done [#allocation11], 128
    $region45: #{tpu_custom_call.1} parent=1 // pred_fallthru
      _
    %1857 = vsyncpa [#allocation4], 1
    %1858 = vsyncpa [#allocation7], 1
    %1859 = vsyncpa [#allocation5], 1
    %1860 = vsyncpa [#allocation11], 1

</llo_original>
